<compile_context>
chip_gen: v5e
topology: v5e:2x2
jax: 0.10.0
libtpu: 0.0.40
codegen_flags: <defaults>
</compile_context>

<pallas_src>
import functools

import jax
import jax.numpy as jnp
from jax.experimental import pallas as pl
from jax.experimental.pallas import tpu as pltpu


# ---------------------------------------------------------------------------
# Fused kernel: row gathers + psi + tiled influence matmul
# ---------------------------------------------------------------------------
def _sstkg_fused_kernel(
    e0_ref,                                   # SMEM [B] int32 (scalar prefetch)
    tr_ref, w_ref, b_ref,                     # VMEM [B,D], [2D,D], [1,D]
    static_hbm, infl_hbm,                     # HBM refs [N,D], [N,N]  (pl.ANY)
    oute_ref,                                 # VMEM [tile_n, T*D] bf16 (streamed)
    static_out_ref, psi_out_ref, inemb_out_ref,   # outputs [B,D], [B,D], [B,T*D]
    s_buf, p_buf, acc_ref, sem_s, sem_p,      # scratch
    *, tile_n, d,
):
    k = pl.program_id(0)
    nk = pl.num_programs(0)
    bsz = s_buf.shape[0]

    @pl.when(k == 0)
    def _init():
        # Gather the B rows selected by e_0 directly HBM -> VMEM (scalar
        # prefetch + manual DMA; avoids an XLA gather round-trip through HBM).
        copies = []
        for b in range(bsz):
            row = e0_ref[b]
            c_s = pltpu.make_async_copy(
                static_hbm.at[pl.ds(row, 1)], s_buf.at[pl.ds(b, 1)], sem_s.at[b]
            )
            c_p = pltpu.make_async_copy(
                infl_hbm.at[pl.ds(row, 1)], p_buf.at[pl.ds(b, 1)], sem_p.at[b]
            )
            c_s.start()
            c_p.start()
            copies.append((c_s, c_p))

        acc_ref[...] = jnp.zeros_like(acc_ref)

        for c_s, c_p in copies:
            c_s.wait()
            c_p.wait()

        # static_emb output + psi() (concat folded into two matmuls).
        s = s_buf[...]
        static_out_ref[...] = s
        z = (
            jnp.dot(s, w_ref[:d, :], preferred_element_type=jnp.float32)
            + jnp.dot(tr_ref[...], w_ref[d:, :], preferred_element_type=jnp.float32)
            + b_ref[...]
        )
        psi_out_ref[...] = jnp.tanh(z)

    # Influence matmul for this reduction tile: [B, tile_n] @ [tile_n, T*D],
    # bf16 operands on the MXU, f32 accumulation in VMEM scratch.
    start = pl.multiple_of(k * tile_n, tile_n)
    p_tile = p_buf[:, pl.ds(start, tile_n)].astype(jnp.bfloat16)
    acc_ref[...] += jnp.dot(p_tile, oute_ref[...], preferred_element_type=jnp.float32)

    @pl.when(k == nk - 1)
    def _finalize():
        inemb_out_ref[...] = acc_ref[...]


def _pick_tile_n(n):
    for cand in (512, 256, 128):
        if n % cand == 0:
            return cand
    return n  # fall back to a single full-extent reduction block


def sstkg_fused_pallas(e_0, temporal_records, psi_w, psi_b,
                       static_embeddings, influence_matrix, out_emb_packed):
    B, D = temporal_records.shape
    N, TD = out_emb_packed.shape
    assert static_embeddings.shape == (N, D)
    assert influence_matrix.shape == (N, N)
    assert psi_w.shape == (2 * D, D)

    tile_n = _pick_tile_n(N)
    nk = N // tile_n

    kernel = functools.partial(_sstkg_fused_kernel, tile_n=tile_n, d=D)

    grid_spec = pltpu.PrefetchScalarGridSpec(
        num_scalar_prefetch=1,
        grid=(nk,),
        in_specs=[
            pl.BlockSpec((B, D), lambda k, e0: (0, 0)),          # temporal_records
            pl.BlockSpec((2 * D, D), lambda k, e0: (0, 0)),      # psi_w
            pl.BlockSpec((1, D), lambda k, e0: (0, 0)),          # psi_b
            pl.BlockSpec(memory_space=pl.ANY),                   # static_embeddings (HBM)
            pl.BlockSpec(memory_space=pl.ANY),                   # influence_matrix (HBM)
            pl.BlockSpec((tile_n, TD), lambda k, e0: (k, 0)),    # out_emb_packed (streamed)
        ],
        out_specs=[
            pl.BlockSpec((B, D), lambda k, e0: (0, 0)),          # static_emb
            pl.BlockSpec((B, D), lambda k, e0: (0, 0)),          # out_emb (psi)
            pl.BlockSpec((B, TD), lambda k, e0: (0, 0)),         # in_emb packed (lane-dense)
        ],
        scratch_shapes=[
            pltpu.VMEM((B, D), jnp.float32),     # gathered static rows
            pltpu.VMEM((B, N), jnp.float32),     # gathered influence rows
            # TODO(synk): for very large N, tile this gather per-k with a
            # double-buffered (2, B, tile_n) scratch instead of holding [B, N].
            pltpu.VMEM((B, TD), jnp.float32),    # f32 accumulator
            pltpu.SemaphoreType.DMA((B,)),       # static gather sems
            pltpu.SemaphoreType.DMA((B,)),       # influence gather sems
        ],
    )

    return pl.pallas_call(
        kernel,
        out_shape=(
            jax.ShapeDtypeStruct((B, D), jnp.float32),
            jax.ShapeDtypeStruct((B, D), jnp.float32),
            jax.ShapeDtypeStruct((B, TD), jnp.float32),
        ),
        grid_spec=grid_spec,
        compiler_params=pltpu.CompilerParams(
            dimension_semantics=("arbitrary",),      # N is a reduction axis
            vmem_limit_bytes=64 * 1024 * 1024,       # budget for v7x's 64 MiB VMEM
        ),
    )(e_0, temporal_records, psi_w, psi_b.reshape(1, D),
      static_embeddings, influence_matrix, out_emb_packed)


# ---------------------------------------------------------------------------
# Parameter initialization (deterministic, mirrors SSTKG.__init__)
# ---------------------------------------------------------------------------
def init_params(key, num_entities, embedding_dim, num_timesteps):
    N, D, T = num_entities, embedding_dim, num_timesteps
    ks = jax.random.split(key, 7 + T)

    influence_matrix = jax.random.normal(ks[0], (N, N), jnp.float32) * 0.1
    category_embeddings = jax.random.normal(ks[1], (N, D), jnp.float32)
    overall_records = jax.random.normal(ks[2], (N, D), jnp.float32)

    # embedding_processor: Linear(2D, D) -> ReLU -> Linear(D, D) -> Tanh
    w1 = jax.random.normal(ks[3], (2 * D, D), jnp.float32) / jnp.sqrt(2.0 * D)
    b1 = jnp.zeros((D,), jnp.float32)
    w2 = jax.random.normal(ks[4], (D, D), jnp.float32) / jnp.sqrt(1.0 * D)
    b2 = jnp.zeros((D,), jnp.float32)

    combined = jnp.concatenate(
        [category_embeddings, jax.nn.sigmoid(overall_records)], axis=1
    )
    h = jax.nn.relu(combined @ w1 + b1)
    static_embeddings = jnp.tanh(h @ w2 + b2)

    # init_dynamic_embeddings: one fresh psi Linear per time step (as in torch).
    out_embs = []
    for t in range(T):
        kw, kt = jax.random.split(ks[7 + t])
        w_t = jax.random.normal(kw, (2 * D, D), jnp.float32) / jnp.sqrt(2.0 * D)
        temporal_t = jax.random.normal(kt, (N, D), jnp.float32)
        comb = jnp.concatenate([static_embeddings, temporal_t], axis=1)
        out_embs.append(jnp.tanh(comb @ w_t))
    out_stack = jnp.stack(out_embs, axis=0)                       # [T, N, D]
    # Lane-dense packing [N, T*D] (bf16 MXU operand; halves HBM traffic).
    out_emb_packed = (
        out_stack.transpose(1, 0, 2).reshape(N, T * D).astype(jnp.bfloat16)
    )

    # fresh psi Linear used inside forward()
    psi_w = jax.random.normal(ks[5], (2 * D, D), jnp.float32) / jnp.sqrt(2.0 * D)
    psi_b = jnp.zeros((D,), jnp.float32)

    return {
        "influence_matrix": influence_matrix,
        "static_embeddings": static_embeddings,
        "out_emb_packed": out_emb_packed,
        "psi_w": psi_w,
        "psi_b": psi_b,
    }


# ---------------------------------------------------------------------------
# Forward (mirrors SSTKG.forward)
# ---------------------------------------------------------------------------
@jax.jit
def sstkg_forward(params, e_0, temporal_records):
    static_emb, out_emb, in_packed = sstkg_fused_pallas(
        e_0, temporal_records,
        params["psi_w"], params["psi_b"],
        params["static_embeddings"], params["influence_matrix"],
        params["out_emb_packed"],
    )
    B, D = static_emb.shape
    T = in_packed.shape[1] // D
    in_emb = in_packed.reshape(B, T, D).transpose(1, 0, 2)        # [T, B, D]
    return static_emb, out_emb, in_emb


if __name__ == "__main__":
    num_entities = 1024
    embedding_dim = 128
    num_timesteps = 2
    batch = 8

    key = jax.random.PRNGKey(0)
    k_params, k_e, k_tr = jax.random.split(key, 3)

    params = init_params(k_params, num_entities, embedding_dim, num_timesteps)
    e_0 = jax.random.randint(k_e, (batch,), 0, num_entities, dtype=jnp.int32)
    temporal_records = jax.random.normal(k_tr, (batch, embedding_dim), jnp.float32)

    static_emb, out_emb, in_emb = sstkg_forward(params, e_0, temporal_records)
    jax.block_until_ready((static_emb, out_emb, in_emb))

    # Plain-JAX reference check of all three outputs.
    ref_static = params["static_embeddings"][e_0]
    ref_out = jnp.tanh(
        jnp.concatenate([ref_static, temporal_records], axis=1) @ params["psi_w"]
        + params["psi_b"]
    )
    p_bf = params["influence_matrix"][e_0].astype(jnp.bfloat16).astype(jnp.float32)
    out_e_f32 = params["out_emb_packed"].astype(jnp.float32)      # [N, T*D]
    ref_in = (p_bf @ out_e_f32).reshape(
        batch, num_timesteps, embedding_dim
    ).transpose(1, 0, 2)

    assert static_emb.shape == (batch, embedding_dim)
    assert out_emb.shape == (batch, embedding_dim)
    assert in_emb.shape == (num_timesteps, batch, embedding_dim)
    assert jnp.allclose(static_emb, ref_static, rtol=1e-5, atol=1e-5)
    assert jnp.allclose(out_emb, ref_out, rtol=1e-2, atol=1e-2)
    assert jnp.allclose(in_emb, ref_in, rtol=1e-2, atol=1e-2)

    print("KERNEL_OK")
</pallas_src>

<mosaic_0001>
module attributes {stable_mosaic.version = 11 : i64} {
  func.func @_sstkg_fused_kernel(%arg0: i32, %arg1: memref<8xi32, #tpu.memory_space<smem>>, %arg2: memref<8x128xf32, #tpu.memory_space<vmem>>, %arg3: memref<256x128xf32, #tpu.memory_space<vmem>>, %arg4: memref<1x128xf32, #tpu.memory_space<vmem>>, %arg5: memref<1024x128xf32, #tpu.memory_space<any>>, %arg6: memref<1024x1024xf32, #tpu.memory_space<any>>, %arg7: memref<512x256xbf16, #tpu.memory_space<vmem>>, %arg8: memref<8x128xf32, #tpu.memory_space<vmem>>, %arg9: memref<8x128xf32, #tpu.memory_space<vmem>>, %arg10: memref<8x256xf32, #tpu.memory_space<vmem>>, %arg11: memref<8x128xf32, #tpu.memory_space<vmem>>, %arg12: memref<8x1024xf32, #tpu.memory_space<vmem>>, %arg13: memref<8x256xf32, #tpu.memory_space<vmem>>, %arg14: memref<8x!tpu.dma_semaphore, #tpu.memory_space<semaphore_mem>>, %arg15: memref<8x!tpu.dma_semaphore, #tpu.memory_space<semaphore_mem>>) attributes {dimension_semantics = [#tpu.dimension_semantics<arbitrary>], iteration_bounds = array<i64: 2>, scalar_prefetch = 1 : i64, scratch_operands = 5 : i64, tpu.core_type = #tpu.core_type<tc>, window_params = [{pipeline_mode = #tpu.pipeline_mode<synchronous>, transform_indices = @transform_0, window_bounds = array<i64: 8, 128>}, {pipeline_mode = #tpu.pipeline_mode<synchronous>, transform_indices = @transform_1, window_bounds = array<i64: 256, 128>}, {pipeline_mode = #tpu.pipeline_mode<synchronous>, transform_indices = @transform_2, window_bounds = array<i64: 1, 128>}, {}, {}, {transform_indices = @transform_5, window_bounds = array<i64: 512, 256>}, {pipeline_mode = #tpu.pipeline_mode<synchronous>, transform_indices = @transform_6, window_bounds = array<i64: 8, 128>}, {pipeline_mode = #tpu.pipeline_mode<synchronous>, transform_indices = @transform_7, window_bounds = array<i64: 8, 128>}, {pipeline_mode = #tpu.pipeline_mode<synchronous>, transform_indices = @transform_8, window_bounds = array<i64: 8, 256>}]} {
    %c0_i32 = arith.constant 0 : i32
    %0 = arith.cmpi eq, %arg0, %c0_i32 : i32
    %1 = arith.extui %0 : i1 to i32
    %c0_i32_0 = arith.constant 0 : i32
    %2 = arith.cmpi ne, %1, %c0_i32_0 : i32
    scf.if %2 {
      %c0_8 = arith.constant 0 : index
      %16 = memref.load %arg1[%c0_8] : memref<8xi32, #tpu.memory_space<smem>>
      %c0_i32_9 = arith.constant 0 : i32
      %c0_i32_10 = arith.constant 0 : i32
      %17 = tpu.memref_slice %arg5[%16, %c0_i32_10] : memref<1024x128xf32, #tpu.memory_space<any>> -> memref<1x128xf32, #tpu.memory_space<any>>
      %c0_i32_11 = arith.constant 0 : i32
      %c0_i32_12 = arith.constant 0 : i32
      %18 = tpu.memref_slice %arg11[%c0_i32_11, %c0_i32_12] : memref<8x128xf32, #tpu.memory_space<vmem>> -> memref<1x128xf32, #tpu.memory_space<vmem>>
      %19 = tpu.memref_slice %arg14[%c0_i32_9] : memref<8x!tpu.dma_semaphore, #tpu.memory_space<semaphore_mem>> -> memref<1x!tpu.dma_semaphore, #tpu.memory_space<semaphore_mem>>
      %20 = tpu.memref_squeeze %19 : memref<1x!tpu.dma_semaphore, #tpu.memory_space<semaphore_mem>> -> memref<!tpu.dma_semaphore, #tpu.memory_space<semaphore_mem>>
      tpu.enqueue_dma source(%17 : memref<1x128xf32, #tpu.memory_space<any>>) target(%18 : memref<1x128xf32, #tpu.memory_space<vmem>>) target_semaphore(%20 : memref<!tpu.dma_semaphore, #tpu.memory_space<semaphore_mem>>)
      %c0_i32_13 = arith.constant 0 : i32
      %c0_i32_14 = arith.constant 0 : i32
      %21 = tpu.memref_slice %arg6[%16, %c0_i32_14] : memref<1024x1024xf32, #tpu.memory_space<any>> -> memref<1x1024xf32, #tpu.memory_space<any>>
      %c0_i32_15 = arith.constant 0 : i32
      %c0_i32_16 = arith.constant 0 : i32
      %22 = tpu.memref_slice %arg12[%c0_i32_15, %c0_i32_16] : memref<8x1024xf32, #tpu.memory_space<vmem>> -> memref<1x1024xf32, #tpu.memory_space<vmem>>
      %23 = tpu.memref_slice %arg15[%c0_i32_13] : memref<8x!tpu.dma_semaphore, #tpu.memory_space<semaphore_mem>> -> memref<1x!tpu.dma_semaphore, #tpu.memory_space<semaphore_mem>>
      %24 = tpu.memref_squeeze %23 : memref<1x!tpu.dma_semaphore, #tpu.memory_space<semaphore_mem>> -> memref<!tpu.dma_semaphore, #tpu.memory_space<semaphore_mem>>
      tpu.enqueue_dma source(%21 : memref<1x1024xf32, #tpu.memory_space<any>>) target(%22 : memref<1x1024xf32, #tpu.memory_space<vmem>>) target_semaphore(%24 : memref<!tpu.dma_semaphore, #tpu.memory_space<semaphore_mem>>)
      %c1 = arith.constant 1 : index
      %25 = memref.load %arg1[%c1] : memref<8xi32, #tpu.memory_space<smem>>
      %c1_i32_17 = arith.constant 1 : i32
      %c0_i32_18 = arith.constant 0 : i32
      %26 = tpu.memref_slice %arg5[%25, %c0_i32_18] : memref<1024x128xf32, #tpu.memory_space<any>> -> memref<1x128xf32, #tpu.memory_space<any>>
      %c1_i32_19 = arith.constant 1 : i32
      %c0_i32_20 = arith.constant 0 : i32
      %27 = tpu.memref_slice %arg11[%c1_i32_19, %c0_i32_20] : memref<8x128xf32, #tpu.memory_space<vmem>> -> memref<1x128xf32, #tpu.memory_space<vmem>>
      %28 = tpu.memref_slice %arg14[%c1_i32_17] : memref<8x!tpu.dma_semaphore, #tpu.memory_space<semaphore_mem>> -> memref<1x!tpu.dma_semaphore, #tpu.memory_space<semaphore_mem>>
      %29 = tpu.memref_squeeze %28 : memref<1x!tpu.dma_semaphore, #tpu.memory_space<semaphore_mem>> -> memref<!tpu.dma_semaphore, #tpu.memory_space<semaphore_mem>>
      tpu.enqueue_dma source(%26 : memref<1x128xf32, #tpu.memory_space<any>>) target(%27 : memref<1x128xf32, #tpu.memory_space<vmem>>) target_semaphore(%29 : memref<!tpu.dma_semaphore, #tpu.memory_space<semaphore_mem>>)
      %c1_i32_21 = arith.constant 1 : i32
      %c0_i32_22 = arith.constant 0 : i32
      %30 = tpu.memref_slice %arg6[%25, %c0_i32_22] : memref<1024x1024xf32, #tpu.memory_space<any>> -> memref<1x1024xf32, #tpu.memory_space<any>>
      %c1_i32_23 = arith.constant 1 : i32
      %c0_i32_24 = arith.constant 0 : i32
      %31 = tpu.memref_slice %arg12[%c1_i32_23, %c0_i32_24] : memref<8x1024xf32, #tpu.memory_space<vmem>> -> memref<1x1024xf32, #tpu.memory_space<vmem>>
      %32 = tpu.memref_slice %arg15[%c1_i32_21] : memref<8x!tpu.dma_semaphore, #tpu.memory_space<semaphore_mem>> -> memref<1x!tpu.dma_semaphore, #tpu.memory_space<semaphore_mem>>
      %33 = tpu.memref_squeeze %32 : memref<1x!tpu.dma_semaphore, #tpu.memory_space<semaphore_mem>> -> memref<!tpu.dma_semaphore, #tpu.memory_space<semaphore_mem>>
      tpu.enqueue_dma source(%30 : memref<1x1024xf32, #tpu.memory_space<any>>) target(%31 : memref<1x1024xf32, #tpu.memory_space<vmem>>) target_semaphore(%33 : memref<!tpu.dma_semaphore, #tpu.memory_space<semaphore_mem>>)
      %c2 = arith.constant 2 : index
      %34 = memref.load %arg1[%c2] : memref<8xi32, #tpu.memory_space<smem>>
      %c2_i32 = arith.constant 2 : i32
      %c0_i32_25 = arith.constant 0 : i32
      %35 = tpu.memref_slice %arg5[%34, %c0_i32_25] : memref<1024x128xf32, #tpu.memory_space<any>> -> memref<1x128xf32, #tpu.memory_space<any>>
      %c2_i32_26 = arith.constant 2 : i32
      %c0_i32_27 = arith.constant 0 : i32
      %36 = tpu.memref_slice %arg11[%c2_i32_26, %c0_i32_27] : memref<8x128xf32, #tpu.memory_space<vmem>> -> memref<1x128xf32, #tpu.memory_space<vmem>>
      %37 = tpu.memref_slice %arg14[%c2_i32] : memref<8x!tpu.dma_semaphore, #tpu.memory_space<semaphore_mem>> -> memref<1x!tpu.dma_semaphore, #tpu.memory_space<semaphore_mem>>
      %38 = tpu.memref_squeeze %37 : memref<1x!tpu.dma_semaphore, #tpu.memory_space<semaphore_mem>> -> memref<!tpu.dma_semaphore, #tpu.memory_space<semaphore_mem>>
      tpu.enqueue_dma source(%35 : memref<1x128xf32, #tpu.memory_space<any>>) target(%36 : memref<1x128xf32, #tpu.memory_space<vmem>>) target_semaphore(%38 : memref<!tpu.dma_semaphore, #tpu.memory_space<semaphore_mem>>)
      %c2_i32_28 = arith.constant 2 : i32
      %c0_i32_29 = arith.constant 0 : i32
      %39 = tpu.memref_slice %arg6[%34, %c0_i32_29] : memref<1024x1024xf32, #tpu.memory_space<any>> -> memref<1x1024xf32, #tpu.memory_space<any>>
      %c2_i32_30 = arith.constant 2 : i32
      %c0_i32_31 = arith.constant 0 : i32
      %40 = tpu.memref_slice %arg12[%c2_i32_30, %c0_i32_31] : memref<8x1024xf32, #tpu.memory_space<vmem>> -> memref<1x1024xf32, #tpu.memory_space<vmem>>
      %41 = tpu.memref_slice %arg15[%c2_i32_28] : memref<8x!tpu.dma_semaphore, #tpu.memory_space<semaphore_mem>> -> memref<1x!tpu.dma_semaphore, #tpu.memory_space<semaphore_mem>>
      %42 = tpu.memref_squeeze %41 : memref<1x!tpu.dma_semaphore, #tpu.memory_space<semaphore_mem>> -> memref<!tpu.dma_semaphore, #tpu.memory_space<semaphore_mem>>
      tpu.enqueue_dma source(%39 : memref<1x1024xf32, #tpu.memory_space<any>>) target(%40 : memref<1x1024xf32, #tpu.memory_space<vmem>>) target_semaphore(%42 : memref<!tpu.dma_semaphore, #tpu.memory_space<semaphore_mem>>)
      %c3 = arith.constant 3 : index
      %43 = memref.load %arg1[%c3] : memref<8xi32, #tpu.memory_space<smem>>
      %c3_i32 = arith.constant 3 : i32
      %c0_i32_32 = arith.constant 0 : i32
      %44 = tpu.memref_slice %arg5[%43, %c0_i32_32] : memref<1024x128xf32, #tpu.memory_space<any>> -> memref<1x128xf32, #tpu.memory_space<any>>
      %c3_i32_33 = arith.constant 3 : i32
      %c0_i32_34 = arith.constant 0 : i32
      %45 = tpu.memref_slice %arg11[%c3_i32_33, %c0_i32_34] : memref<8x128xf32, #tpu.memory_space<vmem>> -> memref<1x128xf32, #tpu.memory_space<vmem>>
      %46 = tpu.memref_slice %arg14[%c3_i32] : memref<8x!tpu.dma_semaphore, #tpu.memory_space<semaphore_mem>> -> memref<1x!tpu.dma_semaphore, #tpu.memory_space<semaphore_mem>>
      %47 = tpu.memref_squeeze %46 : memref<1x!tpu.dma_semaphore, #tpu.memory_space<semaphore_mem>> -> memref<!tpu.dma_semaphore, #tpu.memory_space<semaphore_mem>>
      tpu.enqueue_dma source(%44 : memref<1x128xf32, #tpu.memory_space<any>>) target(%45 : memref<1x128xf32, #tpu.memory_space<vmem>>) target_semaphore(%47 : memref<!tpu.dma_semaphore, #tpu.memory_space<semaphore_mem>>)
      %c3_i32_35 = arith.constant 3 : i32
      %c0_i32_36 = arith.constant 0 : i32
      %48 = tpu.memref_slice %arg6[%43, %c0_i32_36] : memref<1024x1024xf32, #tpu.memory_space<any>> -> memref<1x1024xf32, #tpu.memory_space<any>>
      %c3_i32_37 = arith.constant 3 : i32
      %c0_i32_38 = arith.constant 0 : i32
      %49 = tpu.memref_slice %arg12[%c3_i32_37, %c0_i32_38] : memref<8x1024xf32, #tpu.memory_space<vmem>> -> memref<1x1024xf32, #tpu.memory_space<vmem>>
      %50 = tpu.memref_slice %arg15[%c3_i32_35] : memref<8x!tpu.dma_semaphore, #tpu.memory_space<semaphore_mem>> -> memref<1x!tpu.dma_semaphore, #tpu.memory_space<semaphore_mem>>
      %51 = tpu.memref_squeeze %50 : memref<1x!tpu.dma_semaphore, #tpu.memory_space<semaphore_mem>> -> memref<!tpu.dma_semaphore, #tpu.memory_space<semaphore_mem>>
      tpu.enqueue_dma source(%48 : memref<1x1024xf32, #tpu.memory_space<any>>) target(%49 : memref<1x1024xf32, #tpu.memory_space<vmem>>) target_semaphore(%51 : memref<!tpu.dma_semaphore, #tpu.memory_space<semaphore_mem>>)
      %c4 = arith.constant 4 : index
      %52 = memref.load %arg1[%c4] : memref<8xi32, #tpu.memory_space<smem>>
      %c4_i32 = arith.constant 4 : i32
      %c0_i32_39 = arith.constant 0 : i32
      %53 = tpu.memref_slice %arg5[%52, %c0_i32_39] : memref<1024x128xf32, #tpu.memory_space<any>> -> memref<1x128xf32, #tpu.memory_space<any>>
      %c4_i32_40 = arith.constant 4 : i32
      %c0_i32_41 = arith.constant 0 : i32
      %54 = tpu.memref_slice %arg11[%c4_i32_40, %c0_i32_41] : memref<8x128xf32, #tpu.memory_space<vmem>> -> memref<1x128xf32, #tpu.memory_space<vmem>>
      %55 = tpu.memref_slice %arg14[%c4_i32] : memref<8x!tpu.dma_semaphore, #tpu.memory_space<semaphore_mem>> -> memref<1x!tpu.dma_semaphore, #tpu.memory_space<semaphore_mem>>
      %56 = tpu.memref_squeeze %55 : memref<1x!tpu.dma_semaphore, #tpu.memory_space<semaphore_mem>> -> memref<!tpu.dma_semaphore, #tpu.memory_space<semaphore_mem>>
      tpu.enqueue_dma source(%53 : memref<1x128xf32, #tpu.memory_space<any>>) target(%54 : memref<1x128xf32, #tpu.memory_space<vmem>>) target_semaphore(%56 : memref<!tpu.dma_semaphore, #tpu.memory_space<semaphore_mem>>)
      %c4_i32_42 = arith.constant 4 : i32
      %c0_i32_43 = arith.constant 0 : i32
      %57 = tpu.memref_slice %arg6[%52, %c0_i32_43] : memref<1024x1024xf32, #tpu.memory_space<any>> -> memref<1x1024xf32, #tpu.memory_space<any>>
      %c4_i32_44 = arith.constant 4 : i32
      %c0_i32_45 = arith.constant 0 : i32
      %58 = tpu.memref_slice %arg12[%c4_i32_44, %c0_i32_45] : memref<8x1024xf32, #tpu.memory_space<vmem>> -> memref<1x1024xf32, #tpu.memory_space<vmem>>
      %59 = tpu.memref_slice %arg15[%c4_i32_42] : memref<8x!tpu.dma_semaphore, #tpu.memory_space<semaphore_mem>> -> memref<1x!tpu.dma_semaphore, #tpu.memory_space<semaphore_mem>>
      %60 = tpu.memref_squeeze %59 : memref<1x!tpu.dma_semaphore, #tpu.memory_space<semaphore_mem>> -> memref<!tpu.dma_semaphore, #tpu.memory_space<semaphore_mem>>
      tpu.enqueue_dma source(%57 : memref<1x1024xf32, #tpu.memory_space<any>>) target(%58 : memref<1x1024xf32, #tpu.memory_space<vmem>>) target_semaphore(%60 : memref<!tpu.dma_semaphore, #tpu.memory_space<semaphore_mem>>)
      %c5 = arith.constant 5 : index
      %61 = memref.load %arg1[%c5] : memref<8xi32, #tpu.memory_space<smem>>
      %c5_i32 = arith.constant 5 : i32
      %c0_i32_46 = arith.constant 0 : i32
      %62 = tpu.memref_slice %arg5[%61, %c0_i32_46] : memref<1024x128xf32, #tpu.memory_space<any>> -> memref<1x128xf32, #tpu.memory_space<any>>
      %c5_i32_47 = arith.constant 5 : i32
      %c0_i32_48 = arith.constant 0 : i32
      %63 = tpu.memref_slice %arg11[%c5_i32_47, %c0_i32_48] : memref<8x128xf32, #tpu.memory_space<vmem>> -> memref<1x128xf32, #tpu.memory_space<vmem>>
      %64 = tpu.memref_slice %arg14[%c5_i32] : memref<8x!tpu.dma_semaphore, #tpu.memory_space<semaphore_mem>> -> memref<1x!tpu.dma_semaphore, #tpu.memory_space<semaphore_mem>>
      %65 = tpu.memref_squeeze %64 : memref<1x!tpu.dma_semaphore, #tpu.memory_space<semaphore_mem>> -> memref<!tpu.dma_semaphore, #tpu.memory_space<semaphore_mem>>
      tpu.enqueue_dma source(%62 : memref<1x128xf32, #tpu.memory_space<any>>) target(%63 : memref<1x128xf32, #tpu.memory_space<vmem>>) target_semaphore(%65 : memref<!tpu.dma_semaphore, #tpu.memory_space<semaphore_mem>>)
      %c5_i32_49 = arith.constant 5 : i32
      %c0_i32_50 = arith.constant 0 : i32
      %66 = tpu.memref_slice %arg6[%61, %c0_i32_50] : memref<1024x1024xf32, #tpu.memory_space<any>> -> memref<1x1024xf32, #tpu.memory_space<any>>
      %c5_i32_51 = arith.constant 5 : i32
      %c0_i32_52 = arith.constant 0 : i32
      %67 = tpu.memref_slice %arg12[%c5_i32_51, %c0_i32_52] : memref<8x1024xf32, #tpu.memory_space<vmem>> -> memref<1x1024xf32, #tpu.memory_space<vmem>>
      %68 = tpu.memref_slice %arg15[%c5_i32_49] : memref<8x!tpu.dma_semaphore, #tpu.memory_space<semaphore_mem>> -> memref<1x!tpu.dma_semaphore, #tpu.memory_space<semaphore_mem>>
      %69 = tpu.memref_squeeze %68 : memref<1x!tpu.dma_semaphore, #tpu.memory_space<semaphore_mem>> -> memref<!tpu.dma_semaphore, #tpu.memory_space<semaphore_mem>>
      tpu.enqueue_dma source(%66 : memref<1x1024xf32, #tpu.memory_space<any>>) target(%67 : memref<1x1024xf32, #tpu.memory_space<vmem>>) target_semaphore(%69 : memref<!tpu.dma_semaphore, #tpu.memory_space<semaphore_mem>>)
      %c6 = arith.constant 6 : index
      %70 = memref.load %arg1[%c6] : memref<8xi32, #tpu.memory_space<smem>>
      %c6_i32 = arith.constant 6 : i32
      %c0_i32_53 = arith.constant 0 : i32
      %71 = tpu.memref_slice %arg5[%70, %c0_i32_53] : memref<1024x128xf32, #tpu.memory_space<any>> -> memref<1x128xf32, #tpu.memory_space<any>>
      %c6_i32_54 = arith.constant 6 : i32
      %c0_i32_55 = arith.constant 0 : i32
      %72 = tpu.memref_slice %arg11[%c6_i32_54, %c0_i32_55] : memref<8x128xf32, #tpu.memory_space<vmem>> -> memref<1x128xf32, #tpu.memory_space<vmem>>
      %73 = tpu.memref_slice %arg14[%c6_i32] : memref<8x!tpu.dma_semaphore, #tpu.memory_space<semaphore_mem>> -> memref<1x!tpu.dma_semaphore, #tpu.memory_space<semaphore_mem>>
      %74 = tpu.memref_squeeze %73 : memref<1x!tpu.dma_semaphore, #tpu.memory_space<semaphore_mem>> -> memref<!tpu.dma_semaphore, #tpu.memory_space<semaphore_mem>>
      tpu.enqueue_dma source(%71 : memref<1x128xf32, #tpu.memory_space<any>>) target(%72 : memref<1x128xf32, #tpu.memory_space<vmem>>) target_semaphore(%74 : memref<!tpu.dma_semaphore, #tpu.memory_space<semaphore_mem>>)
      %c6_i32_56 = arith.constant 6 : i32
      %c0_i32_57 = arith.constant 0 : i32
      %75 = tpu.memref_slice %arg6[%70, %c0_i32_57] : memref<1024x1024xf32, #tpu.memory_space<any>> -> memref<1x1024xf32, #tpu.memory_space<any>>
      %c6_i32_58 = arith.constant 6 : i32
      %c0_i32_59 = arith.constant 0 : i32
      %76 = tpu.memref_slice %arg12[%c6_i32_58, %c0_i32_59] : memref<8x1024xf32, #tpu.memory_space<vmem>> -> memref<1x1024xf32, #tpu.memory_space<vmem>>
      %77 = tpu.memref_slice %arg15[%c6_i32_56] : memref<8x!tpu.dma_semaphore, #tpu.memory_space<semaphore_mem>> -> memref<1x!tpu.dma_semaphore, #tpu.memory_space<semaphore_mem>>
      %78 = tpu.memref_squeeze %77 : memref<1x!tpu.dma_semaphore, #tpu.memory_space<semaphore_mem>> -> memref<!tpu.dma_semaphore, #tpu.memory_space<semaphore_mem>>
      tpu.enqueue_dma source(%75 : memref<1x1024xf32, #tpu.memory_space<any>>) target(%76 : memref<1x1024xf32, #tpu.memory_space<vmem>>) target_semaphore(%78 : memref<!tpu.dma_semaphore, #tpu.memory_space<semaphore_mem>>)
      %c7 = arith.constant 7 : index
      %79 = memref.load %arg1[%c7] : memref<8xi32, #tpu.memory_space<smem>>
      %c7_i32 = arith.constant 7 : i32
      %c0_i32_60 = arith.constant 0 : i32
      %80 = tpu.memref_slice %arg5[%79, %c0_i32_60] : memref<1024x128xf32, #tpu.memory_space<any>> -> memref<1x128xf32, #tpu.memory_space<any>>
      %c7_i32_61 = arith.constant 7 : i32
      %c0_i32_62 = arith.constant 0 : i32
      %81 = tpu.memref_slice %arg11[%c7_i32_61, %c0_i32_62] : memref<8x128xf32, #tpu.memory_space<vmem>> -> memref<1x128xf32, #tpu.memory_space<vmem>>
      %82 = tpu.memref_slice %arg14[%c7_i32] : memref<8x!tpu.dma_semaphore, #tpu.memory_space<semaphore_mem>> -> memref<1x!tpu.dma_semaphore, #tpu.memory_space<semaphore_mem>>
      %83 = tpu.memref_squeeze %82 : memref<1x!tpu.dma_semaphore, #tpu.memory_space<semaphore_mem>> -> memref<!tpu.dma_semaphore, #tpu.memory_space<semaphore_mem>>
      tpu.enqueue_dma source(%80 : memref<1x128xf32, #tpu.memory_space<any>>) target(%81 : memref<1x128xf32, #tpu.memory_space<vmem>>) target_semaphore(%83 : memref<!tpu.dma_semaphore, #tpu.memory_space<semaphore_mem>>)
      %c7_i32_63 = arith.constant 7 : i32
      %c0_i32_64 = arith.constant 0 : i32
      %84 = tpu.memref_slice %arg6[%79, %c0_i32_64] : memref<1024x1024xf32, #tpu.memory_space<any>> -> memref<1x1024xf32, #tpu.memory_space<any>>
      %c7_i32_65 = arith.constant 7 : i32
      %c0_i32_66 = arith.constant 0 : i32
      %85 = tpu.memref_slice %arg12[%c7_i32_65, %c0_i32_66] : memref<8x1024xf32, #tpu.memory_space<vmem>> -> memref<1x1024xf32, #tpu.memory_space<vmem>>
      %86 = tpu.memref_slice %arg15[%c7_i32_63] : memref<8x!tpu.dma_semaphore, #tpu.memory_space<semaphore_mem>> -> memref<1x!tpu.dma_semaphore, #tpu.memory_space<semaphore_mem>>
      %87 = tpu.memref_squeeze %86 : memref<1x!tpu.dma_semaphore, #tpu.memory_space<semaphore_mem>> -> memref<!tpu.dma_semaphore, #tpu.memory_space<semaphore_mem>>
      tpu.enqueue_dma source(%84 : memref<1x1024xf32, #tpu.memory_space<any>>) target(%85 : memref<1x1024xf32, #tpu.memory_space<vmem>>) target_semaphore(%87 : memref<!tpu.dma_semaphore, #tpu.memory_space<semaphore_mem>>)
      %cst_67 = arith.constant 0.000000e+00 : f32
      %88 = vector.broadcast %cst_67 : f32 to vector<8x256xf32>
      %c0_68 = arith.constant 0 : index
      %c0_69 = arith.constant 0 : index
      %89 = vector.load %arg13[%c0_68, %c0_69] : memref<8x256xf32, #tpu.memory_space<vmem>>, vector<8x256xf32>
      tpu.vector_store %arg13[%c0_68, %c0_69], %88 {strides = array<i32>} : memref<8x256xf32, #tpu.memory_space<vmem>>, vector<8x256xf32>,
      %c0_i32_70 = arith.constant 0 : i32
      %c0_i32_71 = arith.constant 0 : i32
      %90 = tpu.memref_slice %arg5[%16, %c0_i32_71] : memref<1024x128xf32, #tpu.memory_space<any>> -> memref<1x128xf32, #tpu.memory_space<any>>
      %c0_i32_72 = arith.constant 0 : i32
      %c0_i32_73 = arith.constant 0 : i32
      %91 = tpu.memref_slice %arg11[%c0_i32_72, %c0_i32_73] : memref<8x128xf32, #tpu.memory_space<vmem>> -> memref<1x128xf32, #tpu.memory_space<vmem>>
      %92 = tpu.memref_slice %arg14[%c0_i32_70] : memref<8x!tpu.dma_semaphore, #tpu.memory_space<semaphore_mem>> -> memref<1x!tpu.dma_semaphore, #tpu.memory_space<semaphore_mem>>
      %93 = tpu.memref_squeeze %92 : memref<1x!tpu.dma_semaphore, #tpu.memory_space<semaphore_mem>> -> memref<!tpu.dma_semaphore, #tpu.memory_space<semaphore_mem>>
      tpu.wait_dma2 semaphore(%93 : memref<!tpu.dma_semaphore, #tpu.memory_space<semaphore_mem>>) src(%90 : memref<1x128xf32, #tpu.memory_space<any>>) dst(%91 : memref<1x128xf32, #tpu.memory_space<vmem>>)
      %c0_i32_74 = arith.constant 0 : i32
      %c0_i32_75 = arith.constant 0 : i32
      %94 = tpu.memref_slice %arg6[%16, %c0_i32_75] : memref<1024x1024xf32, #tpu.memory_space<any>> -> memref<1x1024xf32, #tpu.memory_space<any>>
      %c0_i32_76 = arith.constant 0 : i32
      %c0_i32_77 = arith.constant 0 : i32
      %95 = tpu.memref_slice %arg12[%c0_i32_76, %c0_i32_77] : memref<8x1024xf32, #tpu.memory_space<vmem>> -> memref<1x1024xf32, #tpu.memory_space<vmem>>
      %96 = tpu.memref_slice %arg15[%c0_i32_74] : memref<8x!tpu.dma_semaphore, #tpu.memory_space<semaphore_mem>> -> memref<1x!tpu.dma_semaphore, #tpu.memory_space<semaphore_mem>>
      %97 = tpu.memref_squeeze %96 : memref<1x!tpu.dma_semaphore, #tpu.memory_space<semaphore_mem>> -> memref<!tpu.dma_semaphore, #tpu.memory_space<semaphore_mem>>
      tpu.wait_dma2 semaphore(%97 : memref<!tpu.dma_semaphore, #tpu.memory_space<semaphore_mem>>) src(%94 : memref<1x1024xf32, #tpu.memory_space<any>>) dst(%95 : memref<1x1024xf32, #tpu.memory_space<vmem>>)
      %c1_i32_78 = arith.constant 1 : i32
      %c0_i32_79 = arith.constant 0 : i32
      %98 = tpu.memref_slice %arg5[%25, %c0_i32_79] : memref<1024x128xf32, #tpu.memory_space<any>> -> memref<1x128xf32, #tpu.memory_space<any>>
      %c1_i32_80 = arith.constant 1 : i32
      %c0_i32_81 = arith.constant 0 : i32
      %99 = tpu.memref_slice %arg11[%c1_i32_80, %c0_i32_81] : memref<8x128xf32, #tpu.memory_space<vmem>> -> memref<1x128xf32, #tpu.memory_space<vmem>>
      %100 = tpu.memref_slice %arg14[%c1_i32_78] : memref<8x!tpu.dma_semaphore, #tpu.memory_space<semaphore_mem>> -> memref<1x!tpu.dma_semaphore, #tpu.memory_space<semaphore_mem>>
      %101 = tpu.memref_squeeze %100 : memref<1x!tpu.dma_semaphore, #tpu.memory_space<semaphore_mem>> -> memref<!tpu.dma_semaphore, #tpu.memory_space<semaphore_mem>>
      tpu.wait_dma2 semaphore(%101 : memref<!tpu.dma_semaphore, #tpu.memory_space<semaphore_mem>>) src(%98 : memref<1x128xf32, #tpu.memory_space<any>>) dst(%99 : memref<1x128xf32, #tpu.memory_space<vmem>>)
      %c1_i32_82 = arith.constant 1 : i32
      %c0_i32_83 = arith.constant 0 : i32
      %102 = tpu.memref_slice %arg6[%25, %c0_i32_83] : memref<1024x1024xf32, #tpu.memory_space<any>> -> memref<1x1024xf32, #tpu.memory_space<any>>
      %c1_i32_84 = arith.constant 1 : i32
      %c0_i32_85 = arith.constant 0 : i32
      %103 = tpu.memref_slice %arg12[%c1_i32_84, %c0_i32_85] : memref<8x1024xf32, #tpu.memory_space<vmem>> -> memref<1x1024xf32, #tpu.memory_space<vmem>>
      %104 = tpu.memref_slice %arg15[%c1_i32_82] : memref<8x!tpu.dma_semaphore, #tpu.memory_space<semaphore_mem>> -> memref<1x!tpu.dma_semaphore, #tpu.memory_space<semaphore_mem>>
      %105 = tpu.memref_squeeze %104 : memref<1x!tpu.dma_semaphore, #tpu.memory_space<semaphore_mem>> -> memref<!tpu.dma_semaphore, #tpu.memory_space<semaphore_mem>>
      tpu.wait_dma2 semaphore(%105 : memref<!tpu.dma_semaphore, #tpu.memory_space<semaphore_mem>>) src(%102 : memref<1x1024xf32, #tpu.memory_space<any>>) dst(%103 : memref<1x1024xf32, #tpu.memory_space<vmem>>)
      %c2_i32_86 = arith.constant 2 : i32
      %c0_i32_87 = arith.constant 0 : i32
      %106 = tpu.memref_slice %arg5[%34, %c0_i32_87] : memref<1024x128xf32, #tpu.memory_space<any>> -> memref<1x128xf32, #tpu.memory_space<any>>
      %c2_i32_88 = arith.constant 2 : i32
      %c0_i32_89 = arith.constant 0 : i32
      %107 = tpu.memref_slice %arg11[%c2_i32_88, %c0_i32_89] : memref<8x128xf32, #tpu.memory_space<vmem>> -> memref<1x128xf32, #tpu.memory_space<vmem>>
      %108 = tpu.memref_slice %arg14[%c2_i32_86] : memref<8x!tpu.dma_semaphore, #tpu.memory_space<semaphore_mem>> -> memref<1x!tpu.dma_semaphore, #tpu.memory_space<semaphore_mem>>
      %109 = tpu.memref_squeeze %108 : memref<1x!tpu.dma_semaphore, #tpu.memory_space<semaphore_mem>> -> memref<!tpu.dma_semaphore, #tpu.memory_space<semaphore_mem>>
      tpu.wait_dma2 semaphore(%109 : memref<!tpu.dma_semaphore, #tpu.memory_space<semaphore_mem>>) src(%106 : memref<1x128xf32, #tpu.memory_space<any>>) dst(%107 : memref<1x128xf32, #tpu.memory_space<vmem>>)
      %c2_i32_90 = arith.constant 2 : i32
      %c0_i32_91 = arith.constant 0 : i32
      %110 = tpu.memref_slice %arg6[%34, %c0_i32_91] : memref<1024x1024xf32, #tpu.memory_space<any>> -> memref<1x1024xf32, #tpu.memory_space<any>>
      %c2_i32_92 = arith.constant 2 : i32
      %c0_i32_93 = arith.constant 0 : i32
      %111 = tpu.memref_slice %arg12[%c2_i32_92, %c0_i32_93] : memref<8x1024xf32, #tpu.memory_space<vmem>> -> memref<1x1024xf32, #tpu.memory_space<vmem>>
      %112 = tpu.memref_slice %arg15[%c2_i32_90] : memref<8x!tpu.dma_semaphore, #tpu.memory_space<semaphore_mem>> -> memref<1x!tpu.dma_semaphore, #tpu.memory_space<semaphore_mem>>
      %113 = tpu.memref_squeeze %112 : memref<1x!tpu.dma_semaphore, #tpu.memory_space<semaphore_mem>> -> memref<!tpu.dma_semaphore, #tpu.memory_space<semaphore_mem>>
      tpu.wait_dma2 semaphore(%113 : memref<!tpu.dma_semaphore, #tpu.memory_space<semaphore_mem>>) src(%110 : memref<1x1024xf32, #tpu.memory_space<any>>) dst(%111 : memref<1x1024xf32, #tpu.memory_space<vmem>>)
      %c3_i32_94 = arith.constant 3 : i32
      %c0_i32_95 = arith.constant 0 : i32
      %114 = tpu.memref_slice %arg5[%43, %c0_i32_95] : memref<1024x128xf32, #tpu.memory_space<any>> -> memref<1x128xf32, #tpu.memory_space<any>>
      %c3_i32_96 = arith.constant 3 : i32
      %c0_i32_97 = arith.constant 0 : i32
      %115 = tpu.memref_slice %arg11[%c3_i32_96, %c0_i32_97] : memref<8x128xf32, #tpu.memory_space<vmem>> -> memref<1x128xf32, #tpu.memory_space<vmem>>
      %116 = tpu.memref_slice %arg14[%c3_i32_94] : memref<8x!tpu.dma_semaphore, #tpu.memory_space<semaphore_mem>> -> memref<1x!tpu.dma_semaphore, #tpu.memory_space<semaphore_mem>>
      %117 = tpu.memref_squeeze %116 : memref<1x!tpu.dma_semaphore, #tpu.memory_space<semaphore_mem>> -> memref<!tpu.dma_semaphore, #tpu.memory_space<semaphore_mem>>
      tpu.wait_dma2 semaphore(%117 : memref<!tpu.dma_semaphore, #tpu.memory_space<semaphore_mem>>) src(%114 : memref<1x128xf32, #tpu.memory_space<any>>) dst(%115 : memref<1x128xf32, #tpu.memory_space<vmem>>)
      %c3_i32_98 = arith.constant 3 : i32
      %c0_i32_99 = arith.constant 0 : i32
      %118 = tpu.memref_slice %arg6[%43, %c0_i32_99] : memref<1024x1024xf32, #tpu.memory_space<any>> -> memref<1x1024xf32, #tpu.memory_space<any>>
      %c3_i32_100 = arith.constant 3 : i32
      %c0_i32_101 = arith.constant 0 : i32
      %119 = tpu.memref_slice %arg12[%c3_i32_100, %c0_i32_101] : memref<8x1024xf32, #tpu.memory_space<vmem>> -> memref<1x1024xf32, #tpu.memory_space<vmem>>
      %120 = tpu.memref_slice %arg15[%c3_i32_98] : memref<8x!tpu.dma_semaphore, #tpu.memory_space<semaphore_mem>> -> memref<1x!tpu.dma_semaphore, #tpu.memory_space<semaphore_mem>>
      %121 = tpu.memref_squeeze %120 : memref<1x!tpu.dma_semaphore, #tpu.memory_space<semaphore_mem>> -> memref<!tpu.dma_semaphore, #tpu.memory_space<semaphore_mem>>
      tpu.wait_dma2 semaphore(%121 : memref<!tpu.dma_semaphore, #tpu.memory_space<semaphore_mem>>) src(%118 : memref<1x1024xf32, #tpu.memory_space<any>>) dst(%119 : memref<1x1024xf32, #tpu.memory_space<vmem>>)
      %c4_i32_102 = arith.constant 4 : i32
      %c0_i32_103 = arith.constant 0 : i32
      %122 = tpu.memref_slice %arg5[%52, %c0_i32_103] : memref<1024x128xf32, #tpu.memory_space<any>> -> memref<1x128xf32, #tpu.memory_space<any>>
      %c4_i32_104 = arith.constant 4 : i32
      %c0_i32_105 = arith.constant 0 : i32
      %123 = tpu.memref_slice %arg11[%c4_i32_104, %c0_i32_105] : memref<8x128xf32, #tpu.memory_space<vmem>> -> memref<1x128xf32, #tpu.memory_space<vmem>>
      %124 = tpu.memref_slice %arg14[%c4_i32_102] : memref<8x!tpu.dma_semaphore, #tpu.memory_space<semaphore_mem>> -> memref<1x!tpu.dma_semaphore, #tpu.memory_space<semaphore_mem>>
      %125 = tpu.memref_squeeze %124 : memref<1x!tpu.dma_semaphore, #tpu.memory_space<semaphore_mem>> -> memref<!tpu.dma_semaphore, #tpu.memory_space<semaphore_mem>>
      tpu.wait_dma2 semaphore(%125 : memref<!tpu.dma_semaphore, #tpu.memory_space<semaphore_mem>>) src(%122 : memref<1x128xf32, #tpu.memory_space<any>>) dst(%123 : memref<1x128xf32, #tpu.memory_space<vmem>>)
      %c4_i32_106 = arith.constant 4 : i32
      %c0_i32_107 = arith.constant 0 : i32
      %126 = tpu.memref_slice %arg6[%52, %c0_i32_107] : memref<1024x1024xf32, #tpu.memory_space<any>> -> memref<1x1024xf32, #tpu.memory_space<any>>
      %c4_i32_108 = arith.constant 4 : i32
      %c0_i32_109 = arith.constant 0 : i32
      %127 = tpu.memref_slice %arg12[%c4_i32_108, %c0_i32_109] : memref<8x1024xf32, #tpu.memory_space<vmem>> -> memref<1x1024xf32, #tpu.memory_space<vmem>>
      %128 = tpu.memref_slice %arg15[%c4_i32_106] : memref<8x!tpu.dma_semaphore, #tpu.memory_space<semaphore_mem>> -> memref<1x!tpu.dma_semaphore, #tpu.memory_space<semaphore_mem>>
      %129 = tpu.memref_squeeze %128 : memref<1x!tpu.dma_semaphore, #tpu.memory_space<semaphore_mem>> -> memref<!tpu.dma_semaphore, #tpu.memory_space<semaphore_mem>>
      tpu.wait_dma2 semaphore(%129 : memref<!tpu.dma_semaphore, #tpu.memory_space<semaphore_mem>>) src(%126 : memref<1x1024xf32, #tpu.memory_space<any>>) dst(%127 : memref<1x1024xf32, #tpu.memory_space<vmem>>)
      %c5_i32_110 = arith.constant 5 : i32
      %c0_i32_111 = arith.constant 0 : i32
      %130 = tpu.memref_slice %arg5[%61, %c0_i32_111] : memref<1024x128xf32, #tpu.memory_space<any>> -> memref<1x128xf32, #tpu.memory_space<any>>
      %c5_i32_112 = arith.constant 5 : i32
      %c0_i32_113 = arith.constant 0 : i32
      %131 = tpu.memref_slice %arg11[%c5_i32_112, %c0_i32_113] : memref<8x128xf32, #tpu.memory_space<vmem>> -> memref<1x128xf32, #tpu.memory_space<vmem>>
      %132 = tpu.memref_slice %arg14[%c5_i32_110] : memref<8x!tpu.dma_semaphore, #tpu.memory_space<semaphore_mem>> -> memref<1x!tpu.dma_semaphore, #tpu.memory_space<semaphore_mem>>
      %133 = tpu.memref_squeeze %132 : memref<1x!tpu.dma_semaphore, #tpu.memory_space<semaphore_mem>> -> memref<!tpu.dma_semaphore, #tpu.memory_space<semaphore_mem>>
      tpu.wait_dma2 semaphore(%133 : memref<!tpu.dma_semaphore, #tpu.memory_space<semaphore_mem>>) src(%130 : memref<1x128xf32, #tpu.memory_space<any>>) dst(%131 : memref<1x128xf32, #tpu.memory_space<vmem>>)
      %c5_i32_114 = arith.constant 5 : i32
      %c0_i32_115 = arith.constant 0 : i32
      %134 = tpu.memref_slice %arg6[%61, %c0_i32_115] : memref<1024x1024xf32, #tpu.memory_space<any>> -> memref<1x1024xf32, #tpu.memory_space<any>>
      %c5_i32_116 = arith.constant 5 : i32
      %c0_i32_117 = arith.constant 0 : i32
      %135 = tpu.memref_slice %arg12[%c5_i32_116, %c0_i32_117] : memref<8x1024xf32, #tpu.memory_space<vmem>> -> memref<1x1024xf32, #tpu.memory_space<vmem>>
      %136 = tpu.memref_slice %arg15[%c5_i32_114] : memref<8x!tpu.dma_semaphore, #tpu.memory_space<semaphore_mem>> -> memref<1x!tpu.dma_semaphore, #tpu.memory_space<semaphore_mem>>
      %137 = tpu.memref_squeeze %136 : memref<1x!tpu.dma_semaphore, #tpu.memory_space<semaphore_mem>> -> memref<!tpu.dma_semaphore, #tpu.memory_space<semaphore_mem>>
      tpu.wait_dma2 semaphore(%137 : memref<!tpu.dma_semaphore, #tpu.memory_space<semaphore_mem>>) src(%134 : memref<1x1024xf32, #tpu.memory_space<any>>) dst(%135 : memref<1x1024xf32, #tpu.memory_space<vmem>>)
      %c6_i32_118 = arith.constant 6 : i32
      %c0_i32_119 = arith.constant 0 : i32
      %138 = tpu.memref_slice %arg5[%70, %c0_i32_119] : memref<1024x128xf32, #tpu.memory_space<any>> -> memref<1x128xf32, #tpu.memory_space<any>>
      %c6_i32_120 = arith.constant 6 : i32
      %c0_i32_121 = arith.constant 0 : i32
      %139 = tpu.memref_slice %arg11[%c6_i32_120, %c0_i32_121] : memref<8x128xf32, #tpu.memory_space<vmem>> -> memref<1x128xf32, #tpu.memory_space<vmem>>
      %140 = tpu.memref_slice %arg14[%c6_i32_118] : memref<8x!tpu.dma_semaphore, #tpu.memory_space<semaphore_mem>> -> memref<1x!tpu.dma_semaphore, #tpu.memory_space<semaphore_mem>>
      %141 = tpu.memref_squeeze %140 : memref<1x!tpu.dma_semaphore, #tpu.memory_space<semaphore_mem>> -> memref<!tpu.dma_semaphore, #tpu.memory_space<semaphore_mem>>
      tpu.wait_dma2 semaphore(%141 : memref<!tpu.dma_semaphore, #tpu.memory_space<semaphore_mem>>) src(%138 : memref<1x128xf32, #tpu.memory_space<any>>) dst(%139 : memref<1x128xf32, #tpu.memory_space<vmem>>)
      %c6_i32_122 = arith.constant 6 : i32
      %c0_i32_123 = arith.constant 0 : i32
      %142 = tpu.memref_slice %arg6[%70, %c0_i32_123] : memref<1024x1024xf32, #tpu.memory_space<any>> -> memref<1x1024xf32, #tpu.memory_space<any>>
      %c6_i32_124 = arith.constant 6 : i32
      %c0_i32_125 = arith.constant 0 : i32
      %143 = tpu.memref_slice %arg12[%c6_i32_124, %c0_i32_125] : memref<8x1024xf32, #tpu.memory_space<vmem>> -> memref<1x1024xf32, #tpu.memory_space<vmem>>
      %144 = tpu.memref_slice %arg15[%c6_i32_122] : memref<8x!tpu.dma_semaphore, #tpu.memory_space<semaphore_mem>> -> memref<1x!tpu.dma_semaphore, #tpu.memory_space<semaphore_mem>>
      %145 = tpu.memref_squeeze %144 : memref<1x!tpu.dma_semaphore, #tpu.memory_space<semaphore_mem>> -> memref<!tpu.dma_semaphore, #tpu.memory_space<semaphore_mem>>
      tpu.wait_dma2 semaphore(%145 : memref<!tpu.dma_semaphore, #tpu.memory_space<semaphore_mem>>) src(%142 : memref<1x1024xf32, #tpu.memory_space<any>>) dst(%143 : memref<1x1024xf32, #tpu.memory_space<vmem>>)
      %c7_i32_126 = arith.constant 7 : i32
      %c0_i32_127 = arith.constant 0 : i32
      %146 = tpu.memref_slice %arg5[%79, %c0_i32_127] : memref<1024x128xf32, #tpu.memory_space<any>> -> memref<1x128xf32, #tpu.memory_space<any>>
      %c7_i32_128 = arith.constant 7 : i32
      %c0_i32_129 = arith.constant 0 : i32
      %147 = tpu.memref_slice %arg11[%c7_i32_128, %c0_i32_129] : memref<8x128xf32, #tpu.memory_space<vmem>> -> memref<1x128xf32, #tpu.memory_space<vmem>>
      %148 = tpu.memref_slice %arg14[%c7_i32_126] : memref<8x!tpu.dma_semaphore, #tpu.memory_space<semaphore_mem>> -> memref<1x!tpu.dma_semaphore, #tpu.memory_space<semaphore_mem>>
      %149 = tpu.memref_squeeze %148 : memref<1x!tpu.dma_semaphore, #tpu.memory_space<semaphore_mem>> -> memref<!tpu.dma_semaphore, #tpu.memory_space<semaphore_mem>>
      tpu.wait_dma2 semaphore(%149 : memref<!tpu.dma_semaphore, #tpu.memory_space<semaphore_mem>>) src(%146 : memref<1x128xf32, #tpu.memory_space<any>>) dst(%147 : memref<1x128xf32, #tpu.memory_space<vmem>>)
      %c7_i32_130 = arith.constant 7 : i32
      %c0_i32_131 = arith.constant 0 : i32
      %150 = tpu.memref_slice %arg6[%79, %c0_i32_131] : memref<1024x1024xf32, #tpu.memory_space<any>> -> memref<1x1024xf32, #tpu.memory_space<any>>
      %c7_i32_132 = arith.constant 7 : i32
      %c0_i32_133 = arith.constant 0 : i32
      %151 = tpu.memref_slice %arg12[%c7_i32_132, %c0_i32_133] : memref<8x1024xf32, #tpu.memory_space<vmem>> -> memref<1x1024xf32, #tpu.memory_space<vmem>>
      %152 = tpu.memref_slice %arg15[%c7_i32_130] : memref<8x!tpu.dma_semaphore, #tpu.memory_space<semaphore_mem>> -> memref<1x!tpu.dma_semaphore, #tpu.memory_space<semaphore_mem>>
      %153 = tpu.memref_squeeze %152 : memref<1x!tpu.dma_semaphore, #tpu.memory_space<semaphore_mem>> -> memref<!tpu.dma_semaphore, #tpu.memory_space<semaphore_mem>>
      tpu.wait_dma2 semaphore(%153 : memref<!tpu.dma_semaphore, #tpu.memory_space<semaphore_mem>>) src(%150 : memref<1x1024xf32, #tpu.memory_space<any>>) dst(%151 : memref<1x1024xf32, #tpu.memory_space<vmem>>)
      %c0_134 = arith.constant 0 : index
      %c0_135 = arith.constant 0 : index
      %154 = vector.load %arg11[%c0_134, %c0_135] : memref<8x128xf32, #tpu.memory_space<vmem>>, vector<8x128xf32>
      %c0_136 = arith.constant 0 : index
      %c0_137 = arith.constant 0 : index
      %155 = vector.load %arg8[%c0_136, %c0_137] : memref<8x128xf32, #tpu.memory_space<vmem>>, vector<8x128xf32>
      tpu.vector_store %arg8[%c0_136, %c0_137], %154 {strides = array<i32>} : memref<8x128xf32, #tpu.memory_space<vmem>>, vector<8x128xf32>,
      %c0_138 = arith.constant 0 : index
      %c0_139 = arith.constant 0 : index
      %156 = vector.load %arg3[%c0_138, %c0_139] : memref<256x128xf32, #tpu.memory_space<vmem>>, vector<128x128xf32>
      %cst_140 = arith.constant dense<0.000000e+00> : vector<8x128xf32>
      %157 = tpu.matmul %154, %156, %cst_140 {dimension_numbers = #tpu.dot_dimension_numbers<[1], [0], [0], [1], [0, 0, 1, 1], [], []>} : vector<8x128xf32>, vector<128x128xf32>, vector<8x128xf32> -> vector<8x128xf32>
      %c0_141 = arith.constant 0 : index
      %c0_142 = arith.constant 0 : index
      %158 = vector.load %arg2[%c0_141, %c0_142] : memref<8x128xf32, #tpu.memory_space<vmem>>, vector<8x128xf32>
      %c128 = arith.constant 128 : index
      %c0_143 = arith.constant 0 : index
      %159 = vector.load %arg3[%c128, %c0_143] : memref<256x128xf32, #tpu.memory_space<vmem>>, vector<128x128xf32>
      %cst_144 = arith.constant dense<0.000000e+00> : vector<8x128xf32>
      %160 = tpu.matmul %158, %159, %cst_144 {dimension_numbers = #tpu.dot_dimension_numbers<[1], [0], [0], [1], [0, 0, 1, 1], [], []>} : vector<8x128xf32>, vector<128x128xf32>, vector<8x128xf32> -> vector<8x128xf32>
      %161 = arith.addf %157, %160 : vector<8x128xf32>
      %c0_145 = arith.constant 0 : index
      %c0_146 = arith.constant 0 : index
      %162 = vector.load %arg4[%c0_145, %c0_146] : memref<1x128xf32, #tpu.memory_space<vmem>>, vector<1x128xf32>
      %163 = vector.broadcast %162 : vector<1x128xf32> to vector<8x128xf32>
      %164 = arith.addf %161, %163 : vector<8x128xf32>
      %165 = math.tanh %164 : vector<8x128xf32>
      %c0_147 = arith.constant 0 : index
      %c0_148 = arith.constant 0 : index
      %166 = vector.load %arg9[%c0_147, %c0_148] : memref<8x128xf32, #tpu.memory_space<vmem>>, vector<8x128xf32>
      tpu.vector_store %arg9[%c0_147, %c0_148], %165 {strides = array<i32>} : memref<8x128xf32, #tpu.memory_space<vmem>>, vector<8x128xf32>,
    } else {
    }
    %c512_i32 = arith.constant 512 : i32
    %3 = arith.muli %arg0, %c512_i32 : i32
    %4 = tpu.assume_multiple %3, 512 : i32
    %c0 = arith.constant 0 : index
    %5 = arith.index_cast %4 : i32 to index
    %6 = vector.load %arg12[%c0, %5] : memref<8x1024xf32, #tpu.memory_space<vmem>>, vector<8x512xf32>
    %7 = arith.truncf %6 : vector<8x512xf32> to vector<8x512xbf16>
    %c0_1 = arith.constant 0 : index
    %c0_2 = arith.constant 0 : index
    %8 = vector.load %arg13[%c0_1, %c0_2] : memref<8x256xf32, #tpu.memory_space<vmem>>, vector<8x256xf32>
    %c0_3 = arith.constant 0 : index
    %c0_4 = arith.constant 0 : index
    %9 = vector.load %arg7[%c0_3, %c0_4] : memref<512x256xbf16, #tpu.memory_space<vmem>>, vector<512x256xbf16>
    %cst = arith.constant dense<0.000000e+00> : vector<8x256xf32>
    %10 = tpu.matmul %7, %9, %cst {dimension_numbers = #tpu.dot_dimension_numbers<[1], [0], [0], [1], [0, 0, 1, 1], [], []>} : vector<8x512xbf16>, vector<512x256xbf16>, vector<8x256xf32> -> vector<8x256xf32>
    %11 = arith.addf %8, %10 : vector<8x256xf32>
    %c0_5 = arith.constant 0 : index
    %c0_6 = arith.constant 0 : index
    %12 = vector.load %arg13[%c0_5, %c0_6] : memref<8x256xf32, #tpu.memory_space<vmem>>, vector<8x256xf32>
    tpu.vector_store %arg13[%c0_5, %c0_6], %11 {strides = array<i32>} : memref<8x256xf32, #tpu.memory_space<vmem>>, vector<8x256xf32>,
    %c1_i32 = arith.constant 1 : i32
    %13 = arith.cmpi eq, %arg0, %c1_i32 : i32
    %14 = arith.extui %13 : i1 to i32
    %c0_i32_7 = arith.constant 0 : i32
    %15 = arith.cmpi ne, %14, %c0_i32_7 : i32
    scf.if %15 {
      %c0_8 = arith.constant 0 : index
      %c0_9 = arith.constant 0 : index
      %16 = vector.load %arg13[%c0_8, %c0_9] : memref<8x256xf32, #tpu.memory_space<vmem>>, vector<8x256xf32>
      %c0_10 = arith.constant 0 : index
      %c0_11 = arith.constant 0 : index
      %17 = vector.load %arg10[%c0_10, %c0_11] : memref<8x256xf32, #tpu.memory_space<vmem>>, vector<8x256xf32>
      tpu.vector_store %arg10[%c0_10, %c0_11], %16 {strides = array<i32>} : memref<8x256xf32, #tpu.memory_space<vmem>>, vector<8x256xf32>,
    } else {
    }
    return
  }
  func.func @transform_0(%arg0: i32, %arg1: memref<8xi32, #tpu.memory_space<smem>>) -> (i32, i32) {
    %c0_i32 = arith.constant 0 : i32
    %c0_i32_0 = arith.constant 0 : i32
    %c0_i32_1 = arith.constant 0 : i32
    return %c0_i32, %c0_i32_0 : i32, i32
  }
  func.func @transform_1(%arg0: i32, %arg1: memref<8xi32, #tpu.memory_space<smem>>) -> (i32, i32) {
    %c0_i32 = arith.constant 0 : i32
    %c0_i32_0 = arith.constant 0 : i32
    %c0_i32_1 = arith.constant 0 : i32
    return %c0_i32, %c0_i32_0 : i32, i32
  }
  func.func @transform_2(%arg0: i32, %arg1: memref<8xi32, #tpu.memory_space<smem>>) -> (i32, i32) {
    %c0_i32 = arith.constant 0 : i32
    %c0_i32_0 = arith.constant 0 : i32
    %c0_i32_1 = arith.constant 0 : i32
    return %c0_i32, %c0_i32_0 : i32, i32
  }
  func.func @transform_5(%arg0: i32, %arg1: memref<8xi32, #tpu.memory_space<smem>>) -> (i32, i32) {
    %c0_i32 = arith.constant 0 : i32
    %c0_i32_0 = arith.constant 0 : i32
    return %arg0, %c0_i32 : i32, i32
  }
  func.func @transform_6(%arg0: i32, %arg1: memref<8xi32, #tpu.memory_space<smem>>) -> (i32, i32) {
    %c0_i32 = arith.constant 0 : i32
    %c0_i32_0 = arith.constant 0 : i32
    %c0_i32_1 = arith.constant 0 : i32
    return %c0_i32, %c0_i32_0 : i32, i32
  }
  func.func @transform_7(%arg0: i32, %arg1: memref<8xi32, #tpu.memory_space<smem>>) -> (i32, i32) {
    %c0_i32 = arith.constant 0 : i32
    %c0_i32_0 = arith.constant 0 : i32
    %c0_i32_1 = arith.constant 0 : i32
    return %c0_i32, %c0_i32_0 : i32, i32
  }
  func.func @transform_8(%arg0: i32, %arg1: memref<8xi32, #tpu.memory_space<smem>>) -> (i32, i32) {
    %c0_i32 = arith.constant 0 : i32
    %c0_i32_0 = arith.constant 0 : i32
    %c0_i32_1 = arith.constant 0 : i32
    return %c0_i32, %c0_i32_0 : i32, i32
  }
}

</mosaic_0001>

<llo_original>
// kernel: sstkg_forward.1
$region0: #{sstkg_forward.1}
  #allocation0 [shape = 'u32[]', space=smem, size = 0x4, offset = 0x4, fixed_abs, tag = 'smem constant byte address 0x4 - core index']
  #allocation1 [shape = 'u32[72,128]{1,0:T(1,128)}', space=vmem, size = 0x9000, scoped, tag = 'internal scratch']
  #allocation2 [shape = 'f32[8,128]{1,0:T(8,128)}', space=vmem, size = 0x1000, scoped, tag = 'scratch operand']
  #allocation3 [shape = 'f32[8,1024]{1,0:T(8,128)}', space=vmem, size = 0x8000, scoped, tag = 'scratch operand']
  #allocation4 [shape = 'f32[8,256]{1,0:T(8,128)}', space=vmem, size = 0x2000, scoped, tag = 'scratch operand']
  #allocation5 [shape = 's32[8]{0}', space=sflag, size = 0x20, scoped, tag = 'scratch operand']
  #allocation6 [shape = 's32[8]{0}', space=sflag, size = 0x20, scoped, tag = 'scratch operand']
  #allocation7 [shape = 's32[1]{0}', space=sflag, size = 0x4, scoped, tag = 'scoped memory for sstkg_forward.1']
  #allocation8 [shape = 'u8[512]{0}', space=smem, size = 0x200, scoped, tag = 'prefetched SMEM operand 0']
  #allocation21 [shape = 's32[]', space=sflag, size = 0x4, offset = 0, fixed_abs, tag = 'sflag constant byte address 0x0 - dummy sync flag']
  #allocation22 [shape = 's32[]', space=sflag, size = 0x4, offset = 0, fixed_abs, tag = 'sflag constant byte address 0x0 - dummy sync flag']
  #allocation23 [shape = 'u32[]', space=smem, size = 0x4, offset = 0x44, fixed_abs, tag = 'smem constant byte address 0x44 - assertion arg 0']
  #allocation24 [shape = 'u32[]', space=smem, size = 0x4, offset = 0x48, fixed_abs, tag = 'smem constant byte address 0x48 - assertion arg 1']
  #allocation25 [shape = 's32[]', space=sflag, size = 0x4, offset = 0, fixed_abs, tag = 'sflag constant byte address 0x0 - dummy sync flag']
  #allocation26 [shape = 's32[]', space=sflag, size = 0x4, offset = 0, fixed_abs, tag = 'sflag constant byte address 0x0 - dummy sync flag']
  #allocation27 [shape = 's32[]', space=sflag, size = 0x4, offset = 0, fixed_abs, tag = 'sflag constant byte address 0x0 - dummy sync flag']
  #allocation28 [shape = 's32[]', space=sflag, size = 0x4, offset = 0, fixed_abs, tag = 'sflag constant byte address 0x0 - dummy sync flag']
  #allocation29 [shape = 's32[]', space=sflag, size = 0x4, offset = 0, fixed_abs, tag = 'sflag constant byte address 0x0 - dummy sync flag']
  #allocation30 [shape = 's32[]', space=sflag, size = 0x4, offset = 0, fixed_abs, tag = 'sflag constant byte address 0x0 - dummy sync flag']
  #allocation31 [shape = 's32[]', space=sflag, size = 0x4, offset = 0, fixed_abs, tag = 'sflag constant byte address 0x0 - dummy sync flag']
  #allocation32 [shape = 's32[]', space=sflag, size = 0x4, offset = 0, fixed_abs, tag = 'sflag constant byte address 0x0 - dummy sync flag']
  #allocation33 [shape = 's32[]', space=sflag, size = 0x4, offset = 0, fixed_abs, tag = 'sflag constant byte address 0x0 - dummy sync flag']
  #allocation34 [shape = 's32[]', space=sflag, size = 0x4, offset = 0, fixed_abs, tag = 'sflag constant byte address 0x0 - dummy sync flag']
  #allocation35 [shape = 's32[]', space=sflag, size = 0x4, offset = 0, fixed_abs, tag = 'sflag constant byte address 0x0 - dummy sync flag']
  #allocation36 [shape = 's32[]', space=sflag, size = 0x4, offset = 0, fixed_abs, tag = 'sflag constant byte address 0x0 - dummy sync flag']
  #allocation37 [shape = 's32[]', space=sflag, size = 0x4, offset = 0, fixed_abs, tag = 'sflag constant byte address 0x0 - dummy sync flag']
  #allocation38 [shape = 's32[]', space=sflag, size = 0x4, offset = 0, fixed_abs, tag = 'sflag constant byte address 0x0 - dummy sync flag']
  #allocation39 [shape = 's32[]', space=sflag, size = 0x4, offset = 0, fixed_abs, tag = 'sflag constant byte address 0x0 - dummy sync flag']
  #allocation40 [shape = 's32[]', space=sflag, size = 0x4, offset = 0, fixed_abs, tag = 'sflag constant byte address 0x0 - dummy sync flag']
  #allocation41 [shape = 's32[]', space=sflag, size = 0x4, offset = 0, fixed_abs, tag = 'sflag constant byte address 0x0 - dummy sync flag']
  #allocation42 [shape = 's32[]', space=sflag, size = 0x4, offset = 0, fixed_abs, tag = 'sflag constant byte address 0x0 - dummy sync flag']
  #allocation43 [shape = 's32[]', space=sflag, size = 0x4, offset = 0, fixed_abs, tag = 'sflag constant byte address 0x0 - dummy sync flag']
  #allocation44 [shape = 's32[]', space=sflag, size = 0x4, offset = 0, fixed_abs, tag = 'sflag constant byte address 0x0 - dummy sync flag']
  #allocation45 [shape = 's32[]', space=sflag, size = 0x4, offset = 0, fixed_abs, tag = 'sflag constant byte address 0x0 - dummy sync flag']
  #allocation46 [shape = 's32[]', space=sflag, size = 0x4, offset = 0, fixed_abs, tag = 'sflag constant byte address 0x0 - dummy sync flag']
  %s0 = inlined_call_operand.hbm [shape: s32[8], index: 0, kind: input, shape index: {}]
  %s1 = inlined_call_operand.hbm [shape: f32[8,128], index: 1, kind: input, shape index: {}]
  %s2 = inlined_call_operand.hbm [shape: f32[256,128], index: 2, kind: input, shape index: {}]
  %s3 = inlined_call_operand.hbm [shape: f32[1,128], index: 3, kind: input, shape index: {}]
  %s4 = inlined_call_operand.hbm [shape: f32[1024,128], index: 4, kind: input, shape index: {}]
  %s5 = inlined_call_operand.hbm [shape: f32[1024,1024], index: 5, kind: input, shape index: {}]
  %s6 = inlined_call_operand.hbm [shape: bf16[1024,256], index: 6, kind: input, shape index: {}]
  %s7 = inlined_call_operand.hbm [shape: f32[8,128], index: 7, kind: output, shape index: {0}]
  %s8 = inlined_call_operand.hbm [shape: f32[8,128], index: 8, kind: output, shape index: {1}]
  %s9 = inlined_call_operand.hbm [shape: f32[8,256], index: 9, kind: output, shape index: {2}]
  %10 = xla_tuple %s7, %s8, %s9
  %s11 = sld [smem:[#allocation0]]
  $region121: #{sstkg_forward.1} parent=0
    _
  %s13 = ssub.s32 1, %s11
  %s14 = scalar_select 0, %s13, %s11
  %s16 = sshll.u32 %s0, 4
  %s17 = int_to_ptr.hbm [resolvable:$true] %s16
  %19 = dma.hbm_to_smem %s17, 16, [#allocation8], [#allocation7]
  %21 = dma.done [#allocation7], 16
  %22 = sfence
  $region1: #{sstkg_forward.1} parent=0
    #allocation9 [shape = 'u8[4096]{0}', space=vmem, size = 0x1000, scoped, tag = 'input window, operand 1, single buffered']
    #allocation10 [shape = 's32[2]{0}', space=sflag, size = 0x8, scoped, tag = 'scoped memory for sstkg_forward.1']
    #allocation11 [shape = 's32[2]{0}', space=sflag, size = 0x8, scoped, tag = 'scoped memory for sstkg_forward.1']
    #allocation12 [shape = 'u8[131072]{0}', space=vmem, size = 0x20000, scoped, tag = 'input window, operand 2, single buffered']
    #allocation13 [shape = 's32[1]{0}', space=sflag, size = 0x4, scoped, tag = 'scoped memory for sstkg_forward.1']
    #allocation14 [shape = 'u8[512]{0}', space=vmem, size = 0x400, scoped, tag = 'input window, operand 3, single buffered']
    #allocation15 [shape = 'u8[524288]{0}', space=vmem, size = 0x80000, scoped, tag = 'input window, operand 6']
    #allocation16 [shape = 's32[2]{0}', space=sflag, size = 0x8, scoped, tag = 'scoped memory for sstkg_forward.1']
    #allocation17 [shape = 'u8[4096]{0}', space=vmem, size = 0x1000, scoped, tag = 'output window, operand 0, single buffered']
    #allocation18 [shape = 'u8[4096]{0}', space=vmem, size = 0x1000, scoped, tag = 'output window, operand 1, single buffered']
    #allocation19 [shape = 's32[1]{0}', space=sflag, size = 0x4, scoped, tag = 'scoped memory for sstkg_forward.1']
    #allocation20 [shape = 'u8[8192]{0}', space=vmem, size = 0x2000, scoped, tag = 'output window, operand 2, single buffered']
    %23 = vsyncpa [#allocation10], 0
    %24 = vsyncpa [#allocation13], 0
    %25 = vsyncpa [#allocation16], 0
    %s26 = scalar_lea.sflag [#allocation16], 1
    %27 = vsyncpa %s26, 0
    %28 = vsyncpa [#allocation11], 0
    %29 = vsyncpa [#allocation19], 0
    loop: start=0, step=1, limit=4
    $region2: #{sstkg_forward.1} parent=1 // loop_pre_header
      _
    $region3: #{sstkg_forward.1} parent=1 // loop_header
      %s31 = sphi 0, %s35
      %p32 = scmp.ge.s32.totalorder %s31, 4
      %s39 = sphi 0, %s39
      %s41 = sphi 0, %s39
      %s42 = sphi 0, %s41
      %s56 = sphi 0, %s42
      %s60 = sphi 0, %s60
      %s62 = sphi 0, %s60
      %s63 = sphi 0, %s62
      %s77 = sphi 0, %s63
      %s81 = sphi 0, %s81
      %s83 = sphi 0, %s81
      %s84 = sphi 0, %s83
      %s98 = sphi 0, %s84
      %s104 = sphi 0, %s106
      %s107 = sphi 0, %s104
      %s108 = sphi 0, %s107
      %s124 = sphi 0, %s108
      %s128 = sphi 0, %s128
      %s130 = sphi 0, %s128
      %s131 = sphi 0, %s130
      %s145 = sphi 0, %s131
      %s149 = sphi 0, %s149
      %s151 = sphi 0, %s149
      %s152 = sphi 0, %s151
      %s166 = sphi 0, %s152
      %s170 = sphi 0, %s170
      %s172 = sphi 0, %s170
      %s173 = sphi 0, %s172
      %s187 = sphi 0, %s173
    $region4: #{sstkg_forward.1} parent=1 // loop_header_branch
      %34 = sbr.rel (%p32) target = $region8
    $region5: #{sstkg_forward.1} parent=1 // loop_body
      %s36 = ssub.s32 %s31, 1
      %s37 = ssub.s32 %s31, 2
      %s38 = sadd.s32 %s31, 1
      %s40 = sadd.s32 %s39, 1
      %p43 = scmp.eq.s32.totalorder %s31, 1
      %p44 = scmp.ne.s32.totalorder %s39, %s41
      %p45 = scmp.eq.s32.totalorder %s31, 0
      %p46 = por %p44, %p45
      %p47 = scmp.ne.s32.totalorder %s39, %s41
      %p48 = scmp.eq.s32.totalorder %s36, 1
      %p49 = por %p47, %p48
      %p50 = scmp.ne.s32.totalorder %s41, %s42
      %p51 = scmp.eq.s32.totalorder %s36, 0
      %p52 = por %p50, %p51
      %p53 = scmp.ne.s32.totalorder %s41, %s42
      %p54 = scmp.eq.s32.totalorder %s37, 1
      %p55 = por %p53, %p54
      %p57 = scmp.ne.s32.totalorder %s42, %s56
      %p58 = scmp.eq.s32.totalorder %s37, 0
      %p59 = por %p57, %p58
      %s61 = sadd.s32 %s60, 1
      %p64 = scmp.eq.s32.totalorder %s31, 1
      %p65 = scmp.ne.s32.totalorder %s60, %s62
      %p66 = scmp.eq.s32.totalorder %s31, 0
      %p67 = por %p65, %p66
      %p68 = scmp.ne.s32.totalorder %s60, %s62
      %p69 = scmp.eq.s32.totalorder %s36, 1
      %p70 = por %p68, %p69
      %p71 = scmp.ne.s32.totalorder %s62, %s63
      %p72 = scmp.eq.s32.totalorder %s36, 0
      %p73 = por %p71, %p72
      %p74 = scmp.ne.s32.totalorder %s62, %s63
      %p75 = scmp.eq.s32.totalorder %s37, 1
      %p76 = por %p74, %p75
      %p78 = scmp.ne.s32.totalorder %s63, %s77
      %p79 = scmp.eq.s32.totalorder %s37, 0
      %p80 = por %p78, %p79
      %s82 = sadd.s32 %s81, 1
      %p85 = scmp.eq.s32.totalorder %s31, 1
      %p86 = scmp.ne.s32.totalorder %s81, %s83
      %p87 = scmp.eq.s32.totalorder %s31, 0
      %p88 = por %p86, %p87
      %p89 = scmp.ne.s32.totalorder %s81, %s83
      %p90 = scmp.eq.s32.totalorder %s36, 1
      %p91 = por %p89, %p90
      %p92 = scmp.ne.s32.totalorder %s83, %s84
      %p93 = scmp.eq.s32.totalorder %s36, 0
      %p94 = por %p92, %p93
      %p95 = scmp.ne.s32.totalorder %s83, %s84
      %p96 = scmp.eq.s32.totalorder %s37, 1
      %p97 = por %p95, %p96
      %p99 = scmp.ne.s32.totalorder %s84, %s98
      %p100 = scmp.eq.s32.totalorder %s37, 0
      %p101 = por %p99, %p100
      %s102 = ssub.s32 %s31, %s38
      %p103 = scmp.eq.s32.totalorder %s102, 0
      %s105 = sadd.s32 %s104, 1
      %s106 = scalar_select %p103, %s104, %s105
      %p109 = pneg %p103
      %p110 = scmp.eq.s32.totalorder %s31, 1
      %p111 = por %p109, %p110
      %p112 = scmp.ne.s32.totalorder %s104, %s107
      %p113 = scmp.eq.s32.totalorder %s31, 0
      %p114 = por %p112, %p113
      %p115 = scmp.ne.s32.totalorder %s104, %s107
      %p116 = scmp.eq.s32.totalorder %s36, 1
      %p117 = por %p115, %p116
      %p118 = scmp.ne.s32.totalorder %s107, %s108
      %p119 = scmp.eq.s32.totalorder %s36, 0
      %p120 = por %p118, %p119
      %p121 = scmp.ne.s32.totalorder %s107, %s108
      %p122 = scmp.eq.s32.totalorder %s37, 1
      %p123 = por %p121, %p122
      %p125 = scmp.ne.s32.totalorder %s108, %s124
      %p126 = scmp.eq.s32.totalorder %s37, 0
      %p127 = por %p125, %p126
      %s129 = sadd.s32 %s128, 1
      %p132 = scmp.eq.s32.totalorder %s31, 1
      %p133 = scmp.ne.s32.totalorder %s128, %s130
      %p134 = scmp.eq.s32.totalorder %s31, 0
      %p135 = por %p133, %p134
      %p136 = scmp.ne.s32.totalorder %s128, %s130
      %p137 = scmp.eq.s32.totalorder %s36, 1
      %p138 = por %p136, %p137
      %p139 = scmp.ne.s32.totalorder %s130, %s131
      %p140 = scmp.eq.s32.totalorder %s36, 0
      %p141 = por %p139, %p140
      %p142 = scmp.ne.s32.totalorder %s130, %s131
      %p143 = scmp.eq.s32.totalorder %s37, 1
      %p144 = por %p142, %p143
      %p146 = scmp.ne.s32.totalorder %s131, %s145
      %p147 = scmp.eq.s32.totalorder %s37, 0
      %p148 = por %p146, %p147
      %s150 = sadd.s32 %s149, 1
      %p153 = scmp.eq.s32.totalorder %s31, 1
      %p154 = scmp.ne.s32.totalorder %s149, %s151
      %p155 = scmp.eq.s32.totalorder %s31, 0
      %p156 = por %p154, %p155
      %p157 = scmp.ne.s32.totalorder %s149, %s151
      %p158 = scmp.eq.s32.totalorder %s36, 1
      %p159 = por %p157, %p158
      %p160 = scmp.ne.s32.totalorder %s151, %s152
      %p161 = scmp.eq.s32.totalorder %s36, 0
      %p162 = por %p160, %p161
      %p163 = scmp.ne.s32.totalorder %s151, %s152
      %p164 = scmp.eq.s32.totalorder %s37, 1
      %p165 = por %p163, %p164
      %p167 = scmp.ne.s32.totalorder %s152, %s166
      %p168 = scmp.eq.s32.totalorder %s37, 0
      %p169 = por %p167, %p168
      %s171 = sadd.s32 %s170, 1
      %p174 = scmp.eq.s32.totalorder %s31, 1
      %p175 = scmp.ne.s32.totalorder %s170, %s172
      %p176 = scmp.eq.s32.totalorder %s31, 0
      %p177 = por %p175, %p176
      %p178 = scmp.ne.s32.totalorder %s170, %s172
      %p179 = scmp.eq.s32.totalorder %s36, 1
      %p180 = por %p178, %p179
      %p181 = scmp.ne.s32.totalorder %s172, %s173
      %p182 = scmp.eq.s32.totalorder %s36, 0
      %p183 = por %p181, %p182
      %p184 = scmp.ne.s32.totalorder %s172, %s173
      %p185 = scmp.eq.s32.totalorder %s37, 1
      %p186 = por %p184, %p185
      %p188 = scmp.ne.s32.totalorder %s173, %s187
      %p189 = scmp.eq.s32.totalorder %s37, 0
      %p190 = por %p188, %p189
      %p191 = scmp.le.s32.totalorder 1, %s31
      %p192 = scmp.lt.s32.totalorder %s31, 3
      %p193 = pnand %p191, %p192
      %p194 = pneg %p193
      // Predicated region
      $region9: #{sstkg_forward.1} parent=5 // pred_check
        _
      $region10: #{sstkg_forward.1} parent=5 // pred_check_branch
        %196 = sbr.rel (%p193) target = $region12
      $region11: #{sstkg_forward.1} parent=5 // pred_region
        %s197 = ssub.s32 %s31, 1
        // Predicated region
        $region13: #{sstkg_forward.1} parent=11 // pred_check
          %p198 = pneg %p52
        $region14: #{sstkg_forward.1} parent=11 // pred_check_branch
          %200 = sbr.rel (%p198) target = $region16
        $region15: #{sstkg_forward.1} parent=11 // pred_region
          %202 = vsyncadd [#allocation10], 0
          %s204 = sshll.u32 %s1, 4
          %s205 = int_to_ptr.hbm [resolvable:$true] %s204
          %s206 = sshll.u32 [#allocation9], 4
          %s207 = int_to_ptr.vmem [resolvable:$true] %s206
          %209 = dma.hbm_to_vmem [thread:$0]  %s205, 128, %s207, [#allocation10]
        $region16: #{sstkg_forward.1} parent=11 // pred_fallthru
          _
        // Predicated region
        $region17: #{sstkg_forward.1} parent=11 // pred_check
          %p210 = pneg %p73
        $region18: #{sstkg_forward.1} parent=11 // pred_check_branch
          %212 = sbr.rel (%p210) target = $region20
        $region19: #{sstkg_forward.1} parent=11 // pred_region
          %214 = vsyncadd [#allocation13], 0
          %s215 = sshll.u32 %s2, 4
          %s216 = int_to_ptr.hbm [resolvable:$true] %s215
          %s217 = sshll.u32 [#allocation12], 4
          %s218 = int_to_ptr.vmem [resolvable:$true] %s217
          %223 = dma.hbm_to_vmem [thread:$0]  %s216, 4096, %s218, [#allocation13], 128, 128, 8
        $region20: #{sstkg_forward.1} parent=11 // pred_fallthru
          _
        // Predicated region
        $region21: #{sstkg_forward.1} parent=11 // pred_check
          %p224 = pneg %p94
        $region22: #{sstkg_forward.1} parent=11 // pred_check_branch
          %226 = sbr.rel (%p224) target = $region24
        $region23: #{sstkg_forward.1} parent=11 // pred_region
          %228 = vsyncadd [#allocation13], 0
          %s230 = sshll.u32 %s3, 4
          %s231 = int_to_ptr.hbm [resolvable:$true] %s230
          %s232 = sshll.u32 [#allocation14], 4
          %s233 = int_to_ptr.vmem [resolvable:$true] %s232
          %235 = dma.hbm_to_vmem [thread:$0]  %s231, 16, %s233, [#allocation13]
        $region24: #{sstkg_forward.1} parent=11 // pred_fallthru
          _
      $region12: #{sstkg_forward.1} parent=5 // pred_fallthru
        _
      %p236 = scmp.lt.s32.totalorder %s31, 2
      // Predicated region
      $region25: #{sstkg_forward.1} parent=5 // pred_check
        %p237 = pneg %p236
      $region26: #{sstkg_forward.1} parent=5 // pred_check_branch
        %239 = sbr.rel (%p237) target = $region28
      $region27: #{sstkg_forward.1} parent=5 // pred_region
        // Predicated region
        $region29: #{sstkg_forward.1} parent=27 // pred_check
          %p240 = pneg %p114
        $region30: #{sstkg_forward.1} parent=27 // pred_check_branch
          %242 = sbr.rel (%p240) target = $region32
        $region31: #{sstkg_forward.1} parent=27 // pred_region
          %s243 = sand.u32 %s104, 1
          %s244 = scalar_lea.sflag [#allocation16], %s243
          %s245 = sand.u32 %s104, 1
          %s246 = smul.addr %s245, 512
          %s247 = scalar_lea.vmem [#allocation15], %s246
          %s248 = smul.u32 64, %s31
          %250 = vsyncadd %s244, 0
          %s251 = smul.addr %s248, 2
          %s252 = smul.addr %s251, 4
          %s253 = scalar_lea.hbm %s6, %s252
          %s254 = sshll.u32 %s253, 4
          %s255 = int_to_ptr.hbm [resolvable:$true] %s254
          %s256 = sshll.u32 %s247, 4
          %s257 = int_to_ptr.vmem [resolvable:$true] %s256
          %262 = dma.hbm_to_vmem [thread:$0]  %s255, 8192, %s257, %s244, 128, 128, 8
        $region32: #{sstkg_forward.1} parent=27 // pred_fallthru
          _
      $region28: #{sstkg_forward.1} parent=5 // pred_fallthru
        _
      %p263 = scmp.le.s32.totalorder 1, %s31
      %p264 = scmp.lt.s32.totalorder %s31, 3
      %p265 = pnand %p263, %p264
      %p266 = pneg %p265
      // Predicated region
      $region33: #{sstkg_forward.1} parent=5 // pred_check
        _
      $region34: #{sstkg_forward.1} parent=5 // pred_check_branch
        %268 = sbr.rel (%p265) target = $region36
      $region35: #{sstkg_forward.1} parent=5 // pred_region
        %s269 = ssub.s32 %s31, 1
        // Predicated region
        $region37: #{sstkg_forward.1} parent=35 // pred_check
          %p270 = pneg %p52
        $region38: #{sstkg_forward.1} parent=35 // pred_check_branch
          %272 = sbr.rel (%p270) target = $region40
        $region39: #{sstkg_forward.1} parent=35 // pred_region
          %274 = dma.done [#allocation10], 128
        $region40: #{sstkg_forward.1} parent=35 // pred_fallthru
          _
        // Predicated region
        $region41: #{sstkg_forward.1} parent=35 // pred_check
          %p275 = pneg %p73
        $region42: #{sstkg_forward.1} parent=35 // pred_check_branch
          %277 = sbr.rel (%p275) target = $region44
        $region43: #{sstkg_forward.1} parent=35 // pred_region
          %279 = dma.done [#allocation13], 4096
        $region44: #{sstkg_forward.1} parent=35 // pred_fallthru
          _
        // Predicated region
        $region45: #{sstkg_forward.1} parent=35 // pred_check
          %p280 = pneg %p94
        $region46: #{sstkg_forward.1} parent=35 // pred_check_branch
          %282 = sbr.rel (%p280) target = $region48
        $region47: #{sstkg_forward.1} parent=35 // pred_region
          %284 = dma.done [#allocation13], 16
        $region48: #{sstkg_forward.1} parent=35 // pred_fallthru
          _
        %s285 = sand.u32 %s107, 1
        %s286 = scalar_lea.sflag [#allocation16], %s285
        %s287 = sand.u32 %s107, 1
        %s288 = smul.addr %s287, 512
        %s289 = scalar_lea.vmem [#allocation15], %s288
        // Predicated region
        $region49: #{sstkg_forward.1} parent=35 // pred_check
          %p290 = pneg %p120
        $region50: #{sstkg_forward.1} parent=35 // pred_check_branch
          %292 = sbr.rel (%p290) target = $region52
        $region51: #{sstkg_forward.1} parent=35 // pred_region
          %294 = dma.done %s286, 8192
        $region52: #{sstkg_forward.1} parent=35 // pred_fallthru
          _
        %p295 = pneg %p52
        %p296 = pneg %p49
        %p297 = pneg %p73
        %p298 = pneg %p70
        %p299 = pneg %p94
        %p300 = pneg %p91
        %s301 = sand.u32 %s107, 1
        %s302 = scalar_lea.sflag [#allocation16], %s301
        %s303 = sand.u32 %s107, 1
        %s304 = smul.addr %s303, 512
        %s305 = scalar_lea.vmem [#allocation15], %s304
        %p306 = pneg %p120
        %p307 = pneg %p117
        %p308 = pneg %p141
        %p309 = pneg %p138
        %p310 = pneg %p162
        %p311 = pneg %p159
        %p312 = pneg %p183
        %p313 = pneg %p180
        %s314 = smul.u32 64, %s36
        %p315 = scmp.eq.s32.totalorder %s36, 0
        // Predicated region
        $region53: #{sstkg_forward.1} parent=35 // pred_check
          %p316 = pneg %p315
        $region54: #{sstkg_forward.1} parent=35 // pred_check_branch
          %318 = sbr.rel (%p316) target = $region56
        $region55: #{sstkg_forward.1} parent=35 // pred_region
          %s319 = sld [smem:[#allocation8]]
          %s320 = scalar_lea.hbm %s4, %s319
          // Predicated region
          $region57: #{sstkg_forward.1} parent=55 // pred_check
            _
          $region58: #{sstkg_forward.1} parent=55 // pred_check_branch
            %322 = sbr.rel target = $region60
          $region59: #{sstkg_forward.1} parent=55 // pred_region
            %323 = sst [smem:[#allocation23]] [#allocation22]
            %324 = sst [smem:[#allocation24]] [#allocation21]
          $region60: #{sstkg_forward.1} parent=55 // pred_fallthru
            _
          %326 = shalt.err (0)
          %s328 = sshll.u32 %s320, 4
          %s329 = int_to_ptr.hbm [resolvable:$true] %s328
          %s330 = sshll.u32 [#allocation2], 4
          %s331 = int_to_ptr.vmem [resolvable:$true] %s330
          %333 = dma.hbm_to_vmem [thread:$0]  %s329, 16, %s331, [#allocation5]
          %s334 = sshrl.u32 %s319, 3
          %s335 = sand.u32 %s319, 7
          %s336 = smul.u32 %s334, 64
          %s337 = sadd.s32 %s335, %s336
          %s338 = scalar_lea.hbm %s5, %s337
          %s339 = sshll.u32 %s338, 4
          %s340 = int_to_ptr.hbm [resolvable:$true] %s339
          %s341 = sshll.u32 [#allocation3], 4
          %s342 = int_to_ptr.vmem [resolvable:$true] %s341
          %346 = dma.hbm_to_vmem [thread:$0]  %s340, 128, %s342, [#allocation6], 128, 128, 1
          %s347 = sld [smem:[#allocation8 + $0x1]]
          %s348 = scalar_lea.hbm %s4, %s347
          %s349 = scalar_lea.vmem [#allocation2], 1
          %s350 = scalar_lea.sflag [#allocation5], 1
          // Predicated region
          $region61: #{sstkg_forward.1} parent=55 // pred_check
            _
          $region62: #{sstkg_forward.1} parent=55 // pred_check_branch
            %352 = sbr.rel target = $region64
          $region63: #{sstkg_forward.1} parent=55 // pred_region
            %353 = sst [smem:[#allocation23]] [#allocation27]
            %354 = sst [smem:[#allocation24]] [#allocation26]
          $region64: #{sstkg_forward.1} parent=55 // pred_fallthru
            _
          %356 = shalt.err (0)
          %s358 = sshll.u32 %s348, 4
          %s359 = int_to_ptr.hbm [resolvable:$true] %s358
          %s360 = sshll.u32 %s349, 4
          %s361 = int_to_ptr.vmem [resolvable:$true] %s360
          %363 = dma.hbm_to_vmem [thread:$0]  %s359, 16, %s361, %s350
          %s364 = sshrl.u32 %s347, 3
          %s365 = sand.u32 %s347, 7
          %s366 = smul.u32 %s364, 64
          %s367 = sadd.s32 %s365, %s366
          %s368 = scalar_lea.hbm %s5, %s367
          %s369 = scalar_lea.vmem [#allocation3], 1
          %s370 = scalar_lea.sflag [#allocation6], 1
          %s371 = sshll.u32 %s368, 4
          %s372 = int_to_ptr.hbm [resolvable:$true] %s371
          %s373 = sshll.u32 %s369, 4
          %s374 = int_to_ptr.vmem [resolvable:$true] %s373
          %378 = dma.hbm_to_vmem [thread:$0]  %s372, 128, %s374, %s370, 128, 128, 1
          %s379 = sld [smem:[#allocation8 + $0x2]]
          %s380 = scalar_lea.hbm %s4, %s379
          %s381 = scalar_lea.vmem [#allocation2], 2
          %s382 = scalar_lea.sflag [#allocation5], 2
          // Predicated region
          $region65: #{sstkg_forward.1} parent=55 // pred_check
            _
          $region66: #{sstkg_forward.1} parent=55 // pred_check_branch
            %384 = sbr.rel target = $region68
          $region67: #{sstkg_forward.1} parent=55 // pred_region
            %385 = sst [smem:[#allocation23]] [#allocation30]
            %386 = sst [smem:[#allocation24]] [#allocation29]
          $region68: #{sstkg_forward.1} parent=55 // pred_fallthru
            _
          %388 = shalt.err (0)
          %s390 = sshll.u32 %s380, 4
          %s391 = int_to_ptr.hbm [resolvable:$true] %s390
          %s392 = sshll.u32 %s381, 4
          %s393 = int_to_ptr.vmem [resolvable:$true] %s392
          %395 = dma.hbm_to_vmem [thread:$0]  %s391, 16, %s393, %s382
          %s396 = sshrl.u32 %s379, 3
          %s397 = sand.u32 %s379, 7
          %s398 = smul.u32 %s396, 64
          %s399 = sadd.s32 %s397, %s398
          %s400 = scalar_lea.hbm %s5, %s399
          %s401 = scalar_lea.vmem [#allocation3], 2
          %s402 = scalar_lea.sflag [#allocation6], 2
          %s403 = sshll.u32 %s400, 4
          %s404 = int_to_ptr.hbm [resolvable:$true] %s403
          %s405 = sshll.u32 %s401, 4
          %s406 = int_to_ptr.vmem [resolvable:$true] %s405
          %410 = dma.hbm_to_vmem [thread:$0]  %s404, 128, %s406, %s402, 128, 128, 1
          %s411 = sld [smem:[#allocation8 + $0x3]]
          %s412 = scalar_lea.hbm %s4, %s411
          %s413 = scalar_lea.vmem [#allocation2], 3
          %s414 = scalar_lea.sflag [#allocation5], 3
          // Predicated region
          $region69: #{sstkg_forward.1} parent=55 // pred_check
            _
          $region70: #{sstkg_forward.1} parent=55 // pred_check_branch
            %416 = sbr.rel target = $region72
          $region71: #{sstkg_forward.1} parent=55 // pred_region
            %417 = sst [smem:[#allocation23]] [#allocation33]
            %418 = sst [smem:[#allocation24]] [#allocation32]
          $region72: #{sstkg_forward.1} parent=55 // pred_fallthru
            _
          %420 = shalt.err (0)
          %s422 = sshll.u32 %s412, 4
          %s423 = int_to_ptr.hbm [resolvable:$true] %s422
          %s424 = sshll.u32 %s413, 4
          %s425 = int_to_ptr.vmem [resolvable:$true] %s424
          %427 = dma.hbm_to_vmem [thread:$0]  %s423, 16, %s425, %s414
          %s428 = sshrl.u32 %s411, 3
          %s429 = sand.u32 %s411, 7
          %s430 = smul.u32 %s428, 64
          %s431 = sadd.s32 %s429, %s430
          %s432 = scalar_lea.hbm %s5, %s431
          %s433 = scalar_lea.vmem [#allocation3], 3
          %s434 = scalar_lea.sflag [#allocation6], 3
          %s435 = sshll.u32 %s432, 4
          %s436 = int_to_ptr.hbm [resolvable:$true] %s435
          %s437 = sshll.u32 %s433, 4
          %s438 = int_to_ptr.vmem [resolvable:$true] %s437
          %442 = dma.hbm_to_vmem [thread:$0]  %s436, 128, %s438, %s434, 128, 128, 1
          %s443 = sld [smem:[#allocation8 + $0x4]]
          %s444 = scalar_lea.hbm %s4, %s443
          %s445 = scalar_lea.vmem [#allocation2], 4
          %s446 = scalar_lea.sflag [#allocation5], 4
          // Predicated region
          $region73: #{sstkg_forward.1} parent=55 // pred_check
            _
          $region74: #{sstkg_forward.1} parent=55 // pred_check_branch
            %448 = sbr.rel target = $region76
          $region75: #{sstkg_forward.1} parent=55 // pred_region
            %449 = sst [smem:[#allocation23]] [#allocation36]
            %450 = sst [smem:[#allocation24]] [#allocation35]
          $region76: #{sstkg_forward.1} parent=55 // pred_fallthru
            _
          %452 = shalt.err (0)
          %s454 = sshll.u32 %s444, 4
          %s455 = int_to_ptr.hbm [resolvable:$true] %s454
          %s456 = sshll.u32 %s445, 4
          %s457 = int_to_ptr.vmem [resolvable:$true] %s456
          %459 = dma.hbm_to_vmem [thread:$0]  %s455, 16, %s457, %s446
          %s460 = sshrl.u32 %s443, 3
          %s461 = sand.u32 %s443, 7
          %s462 = smul.u32 %s460, 64
          %s463 = sadd.s32 %s461, %s462
          %s464 = scalar_lea.hbm %s5, %s463
          %s465 = scalar_lea.vmem [#allocation3], 4
          %s466 = scalar_lea.sflag [#allocation6], 4
          %s467 = sshll.u32 %s464, 4
          %s468 = int_to_ptr.hbm [resolvable:$true] %s467
          %s469 = sshll.u32 %s465, 4
          %s470 = int_to_ptr.vmem [resolvable:$true] %s469
          %474 = dma.hbm_to_vmem [thread:$0]  %s468, 128, %s470, %s466, 128, 128, 1
          %s475 = sld [smem:[#allocation8 + $0x5]]
          %s476 = scalar_lea.hbm %s4, %s475
          %s477 = scalar_lea.vmem [#allocation2], 5
          %s478 = scalar_lea.sflag [#allocation5], 5
          // Predicated region
          $region77: #{sstkg_forward.1} parent=55 // pred_check
            _
          $region78: #{sstkg_forward.1} parent=55 // pred_check_branch
            %480 = sbr.rel target = $region80
          $region79: #{sstkg_forward.1} parent=55 // pred_region
            %481 = sst [smem:[#allocation23]] [#allocation39]
            %482 = sst [smem:[#allocation24]] [#allocation38]
          $region80: #{sstkg_forward.1} parent=55 // pred_fallthru
            _
          %484 = shalt.err (0)
          %s486 = sshll.u32 %s476, 4
          %s487 = int_to_ptr.hbm [resolvable:$true] %s486
          %s488 = sshll.u32 %s477, 4
          %s489 = int_to_ptr.vmem [resolvable:$true] %s488
          %491 = dma.hbm_to_vmem [thread:$0]  %s487, 16, %s489, %s478
          %s492 = sshrl.u32 %s475, 3
          %s493 = sand.u32 %s475, 7
          %s494 = smul.u32 %s492, 64
          %s495 = sadd.s32 %s493, %s494
          %s496 = scalar_lea.hbm %s5, %s495
          %s497 = scalar_lea.vmem [#allocation3], 5
          %s498 = scalar_lea.sflag [#allocation6], 5
          %s499 = sshll.u32 %s496, 4
          %s500 = int_to_ptr.hbm [resolvable:$true] %s499
          %s501 = sshll.u32 %s497, 4
          %s502 = int_to_ptr.vmem [resolvable:$true] %s501
          %506 = dma.hbm_to_vmem [thread:$0]  %s500, 128, %s502, %s498, 128, 128, 1
          %s507 = sld [smem:[#allocation8 + $0x6]]
          %s508 = scalar_lea.hbm %s4, %s507
          %s509 = scalar_lea.vmem [#allocation2], 6
          %s510 = scalar_lea.sflag [#allocation5], 6
          // Predicated region
          $region81: #{sstkg_forward.1} parent=55 // pred_check
            _
          $region82: #{sstkg_forward.1} parent=55 // pred_check_branch
            %512 = sbr.rel target = $region84
          $region83: #{sstkg_forward.1} parent=55 // pred_region
            %513 = sst [smem:[#allocation23]] [#allocation42]
            %514 = sst [smem:[#allocation24]] [#allocation41]
          $region84: #{sstkg_forward.1} parent=55 // pred_fallthru
            _
          %516 = shalt.err (0)
          %s518 = sshll.u32 %s508, 4
          %s519 = int_to_ptr.hbm [resolvable:$true] %s518
          %s520 = sshll.u32 %s509, 4
          %s521 = int_to_ptr.vmem [resolvable:$true] %s520
          %523 = dma.hbm_to_vmem [thread:$0]  %s519, 16, %s521, %s510
          %s524 = sshrl.u32 %s507, 3
          %s525 = sand.u32 %s507, 7
          %s526 = smul.u32 %s524, 64
          %s527 = sadd.s32 %s525, %s526
          %s528 = scalar_lea.hbm %s5, %s527
          %s529 = scalar_lea.vmem [#allocation3], 6
          %s530 = scalar_lea.sflag [#allocation6], 6
          %s531 = sshll.u32 %s528, 4
          %s532 = int_to_ptr.hbm [resolvable:$true] %s531
          %s533 = sshll.u32 %s529, 4
          %s534 = int_to_ptr.vmem [resolvable:$true] %s533
          %538 = dma.hbm_to_vmem [thread:$0]  %s532, 128, %s534, %s530, 128, 128, 1
          %s539 = sld [smem:[#allocation8 + $0x7]]
          %s540 = scalar_lea.hbm %s4, %s539
          %s541 = scalar_lea.vmem [#allocation2], 7
          %s542 = scalar_lea.sflag [#allocation5], 7
          // Predicated region
          $region85: #{sstkg_forward.1} parent=55 // pred_check
            _
          $region86: #{sstkg_forward.1} parent=55 // pred_check_branch
            %544 = sbr.rel target = $region88
          $region87: #{sstkg_forward.1} parent=55 // pred_region
            %545 = sst [smem:[#allocation23]] [#allocation45]
            %546 = sst [smem:[#allocation24]] [#allocation44]
          $region88: #{sstkg_forward.1} parent=55 // pred_fallthru
            _
          %548 = shalt.err (0)
          %s550 = sshll.u32 %s540, 4
          %s551 = int_to_ptr.hbm [resolvable:$true] %s550
          %s552 = sshll.u32 %s541, 4
          %s553 = int_to_ptr.vmem [resolvable:$true] %s552
          %555 = dma.hbm_to_vmem [thread:$0]  %s551, 16, %s553, %s542
          %s556 = sshrl.u32 %s539, 3
          %s557 = sand.u32 %s539, 7
          %s558 = smul.u32 %s556, 64
          %s559 = sadd.s32 %s557, %s558
          %s560 = scalar_lea.hbm %s5, %s559
          %s561 = scalar_lea.vmem [#allocation3], 7
          %s562 = scalar_lea.sflag [#allocation6], 7
          %s563 = sshll.u32 %s560, 4
          %s564 = int_to_ptr.hbm [resolvable:$true] %s563
          %s565 = sshll.u32 %s561, 4
          %s566 = int_to_ptr.vmem [resolvable:$true] %s565
          %570 = dma.hbm_to_vmem [thread:$0]  %s564, 128, %s566, %s562, 128, 128, 1
          %571 = vst [vmem:[#allocation4] sm:$0xff] 0.0
          %572 = vst [vmem:[#allocation4 + $0x8] sm:$0xff] 0.0
          %s573 = smul.u32 1, 1
          %s574 = sshll.u32 %s573, 4
          %575 = dma.done [#allocation5], %s574
          %s576 = smul.u32 1, 8
          %s577 = sshll.u32 %s576, 4
          %578 = dma.done [#allocation6], %s577
          %s579 = sshll.u32 %s573, 4
          %580 = dma.done %s350, %s579
          %s581 = sshll.u32 %s576, 4
          %582 = dma.done %s370, %s581
          %s583 = sshll.u32 %s573, 4
          %584 = dma.done %s382, %s583
          %s585 = sshll.u32 %s576, 4
          %586 = dma.done %s402, %s585
          %s587 = sshll.u32 %s573, 4
          %588 = dma.done %s414, %s587
          %s589 = sshll.u32 %s576, 4
          %590 = dma.done %s434, %s589
          %s591 = sshll.u32 %s573, 4
          %592 = dma.done %s446, %s591
          %s593 = sshll.u32 %s576, 4
          %594 = dma.done %s466, %s593
          %s595 = sshll.u32 %s573, 4
          %596 = dma.done %s478, %s595
          %s597 = sshll.u32 %s576, 4
          %598 = dma.done %s498, %s597
          %s599 = sshll.u32 %s573, 4
          %600 = dma.done %s510, %s599
          %s601 = sshll.u32 %s576, 4
          %602 = dma.done %s530, %s601
          %s603 = sshll.u32 %s573, 4
          %604 = dma.done %s542, %s603
          %s605 = sshll.u32 %s576, 4
          %606 = dma.done %s562, %s605
          %v607 = vld [vmem:[#allocation2] sm:$0xff]
          %608 = vst [vmem:[#allocation17] sm:$0xff] %v607
          %v609 = vld [vmem:[#allocation12] sm:$0xff]
          %v610 = vld [vmem:[#allocation12 + $0x8] sm:$0xff]
          %v611 = vld [vmem:[#allocation12 + $0x10] sm:$0xff]
          %v612 = vld [vmem:[#allocation12 + $0x18] sm:$0xff]
          %v613 = vld [vmem:[#allocation12 + $0x20] sm:$0xff]
          %v614 = vld [vmem:[#allocation12 + $0x28] sm:$0xff]
          %v615 = vld [vmem:[#allocation12 + $0x30] sm:$0xff]
          %v616 = vld [vmem:[#allocation12 + $0x38] sm:$0xff]
          %v617 = vld [vmem:[#allocation12 + $0x40] sm:$0xff]
          %v618 = vld [vmem:[#allocation12 + $0x48] sm:$0xff]
          %v619 = vld [vmem:[#allocation12 + $0x50] sm:$0xff]
          %v620 = vld [vmem:[#allocation12 + $0x58] sm:$0xff]
          %v621 = vld [vmem:[#allocation12 + $0x60] sm:$0xff]
          %v622 = vld [vmem:[#allocation12 + $0x68] sm:$0xff]
          %v623 = vld [vmem:[#allocation12 + $0x70] sm:$0xff]
          %v624 = vld [vmem:[#allocation12 + $0x78] sm:$0xff]
          %v625 = vld [vmem:[#allocation9] sm:$0xff]
          %v626 = vld [vmem:[#allocation12 + $0x80] sm:$0xff]
          %v627 = vld [vmem:[#allocation12 + $0x88] sm:$0xff]
          %v628 = vld [vmem:[#allocation12 + $0x90] sm:$0xff]
          %v629 = vld [vmem:[#allocation12 + $0x98] sm:$0xff]
          %v630 = vld [vmem:[#allocation12 + $0xa0] sm:$0xff]
          %v631 = vld [vmem:[#allocation12 + $0xa8] sm:$0xff]
          %v632 = vld [vmem:[#allocation12 + $0xb0] sm:$0xff]
          %v633 = vld [vmem:[#allocation12 + $0xb8] sm:$0xff]
          %v634 = vld [vmem:[#allocation12 + $0xc0] sm:$0xff]
          %v635 = vld [vmem:[#allocation12 + $0xc8] sm:$0xff]
          %v636 = vld [vmem:[#allocation12 + $0xd0] sm:$0xff]
          %v637 = vld [vmem:[#allocation12 + $0xd8] sm:$0xff]
          %v638 = vld [vmem:[#allocation12 + $0xe0] sm:$0xff]
          %v639 = vld [vmem:[#allocation12 + $0xe8] sm:$0xff]
          %v640 = vld [vmem:[#allocation12 + $0xf0] sm:$0xff]
          %v641 = vld [vmem:[#allocation12 + $0xf8] sm:$0xff]
          %642 = vmatpush.msra.mxu0 %v641
          %643 = vmatpush.msra.mxu0 %v640
          %644 = vmatpush.msra.mxu0 %v639
          %645 = vmatpush.msra.mxu0 %v638
          %646 = vmatpush.msra.mxu0 %v637
          %647 = vmatpush.msra.mxu0 %v636
          %648 = vmatpush.msra.mxu0 %v635
          %649 = vmatpush.msra.mxu0 %v634
          %650 = vmatpush.msra.mxu0 %v633
          %651 = vmatpush.msra.mxu0 %v632
          %652 = vmatpush.msra.mxu0 %v631
          %653 = vmatpush.msra.mxu0 %v630
          %654 = vmatpush.msra.mxu0 %v629
          %655 = vmatpush.msra.mxu0 %v628
          %656 = vmatpush.msra.mxu0 %v627
          %657 = vmatpush.msra.mxu0 %v626
          %658 = vmatmul.f32.gmra.mxu0 %v625
          %v659 = vpop.f32.mrf.mxu0
          %v660 = vadd.f32 0.0, %v659
          %661 = vdwg.mxu0
          %662 = vmatpush.msra.mxu0 %v624
          %663 = vmatpush.msra.mxu0 %v623
          %664 = vmatpush.msra.mxu0 %v622
          %665 = vmatpush.msra.mxu0 %v621
          %666 = vmatpush.msra.mxu0 %v620
          %667 = vmatpush.msra.mxu0 %v619
          %668 = vmatpush.msra.mxu0 %v618
          %669 = vmatpush.msra.mxu0 %v617
          %670 = vmatpush.msra.mxu0 %v616
          %671 = vmatpush.msra.mxu0 %v615
          %672 = vmatpush.msra.mxu0 %v614
          %673 = vmatpush.msra.mxu0 %v613
          %674 = vmatpush.msra.mxu0 %v612
          %675 = vmatpush.msra.mxu0 %v611
          %676 = vmatpush.msra.mxu0 %v610
          %677 = vmatpush.msra.mxu0 %v609
          %678 = vmatmul.f32.gmra.mxu0 %v607
          %v679 = vpop.f32.mrf.mxu0
          %v680 = vadd.f32 %v660, %v679
          %681 = vdwg.mxu0
          %v682 = vld [vmem:[#allocation14] sm:$0x1]
          %v684 = vperm.slane %v682, 0
          %v686 = vadd.f32 %v680, %v684
          %v687 = vtanh.pop %v686
          %688 = vst [vmem:[#allocation18] sm:$0xff] %v687
        $region56: #{sstkg_forward.1} parent=35 // pred_fallthru
          _
        %s689 = smul.u32 %s36, 512
        %s690 = sshra.s32 %s689, 7
        %s691 = sand.u32 %s689, 127
        %s692 = smul.addr %s690, 8
        %s693 = scalar_lea.vmem [#allocation3], %s692
        %v694 = vld [vmem:[%s693] sm:$0xff]
        %v695 = vld [vmem:[%s693 + $0x8] sm:$0xff]
        %v696 = vld [vmem:[%s693 + $0x10] sm:$0xff]
        %v697 = vld [vmem:[%s693 + $0x18] sm:$0xff]
        %v698 = vpack.c.bf16 %v694, %v694
        %v699 = vpack.c.bf16 %v695, %v695
        %v700 = vpack.c.bf16 %v696, %v696
        %v701 = vpack.c.bf16 %v697, %v697
        %v702 = vld [vmem:[#allocation4] sm:$0xff]
        %v703 = vld [vmem:[#allocation4 + $0x8] sm:$0xff]
        %v704 = vld [vmem:[%s289] sm:$0xff]
        %v705 = vld [vmem:[%s289 + $0x8] sm:$0xff]
        %v706 = vld [vmem:[%s289 + $0x10] sm:$0xff]
        %v707 = vld [vmem:[%s289 + $0x18] sm:$0xff]
        %v708 = vld [vmem:[%s289 + $0x20] sm:$0xff]
        %v709 = vld [vmem:[%s289 + $0x28] sm:$0xff]
        %v710 = vld [vmem:[%s289 + $0x30] sm:$0xff]
        %v711 = vld [vmem:[%s289 + $0x38] sm:$0xff]
        %v712 = vld [vmem:[%s289 + $0x40] sm:$0xff]
        %v713 = vld [vmem:[%s289 + $0x48] sm:$0xff]
        %v714 = vld [vmem:[%s289 + $0x50] sm:$0xff]
        %v715 = vld [vmem:[%s289 + $0x58] sm:$0xff]
        %v716 = vld [vmem:[%s289 + $0x60] sm:$0xff]
        %v717 = vld [vmem:[%s289 + $0x68] sm:$0xff]
        %v718 = vld [vmem:[%s289 + $0x70] sm:$0xff]
        %v719 = vld [vmem:[%s289 + $0x78] sm:$0xff]
        %v720 = vld [vmem:[%s289 + $0x80] sm:$0xff]
        %v721 = vld [vmem:[%s289 + $0x88] sm:$0xff]
        %v722 = vld [vmem:[%s289 + $0x90] sm:$0xff]
        %v723 = vld [vmem:[%s289 + $0x98] sm:$0xff]
        %v724 = vld [vmem:[%s289 + $0xa0] sm:$0xff]
        %v725 = vld [vmem:[%s289 + $0xa8] sm:$0xff]
        %v726 = vld [vmem:[%s289 + $0xb0] sm:$0xff]
        %v727 = vld [vmem:[%s289 + $0xb8] sm:$0xff]
        %v728 = vld [vmem:[%s289 + $0xc0] sm:$0xff]
        %v729 = vld [vmem:[%s289 + $0xc8] sm:$0xff]
        %v730 = vld [vmem:[%s289 + $0xd0] sm:$0xff]
        %v731 = vld [vmem:[%s289 + $0xd8] sm:$0xff]
        %v732 = vld [vmem:[%s289 + $0xe0] sm:$0xff]
        %v733 = vld [vmem:[%s289 + $0xe8] sm:$0xff]
        %v734 = vld [vmem:[%s289 + $0xf0] sm:$0xff]
        %v735 = vld [vmem:[%s289 + $0xf8] sm:$0xff]
        %v736 = vld [vmem:[%s289 + $0x100] sm:$0xff]
        %v737 = vld [vmem:[%s289 + $0x108] sm:$0xff]
        %v738 = vld [vmem:[%s289 + $0x110] sm:$0xff]
        %v739 = vld [vmem:[%s289 + $0x118] sm:$0xff]
        %v740 = vld [vmem:[%s289 + $0x120] sm:$0xff]
        %v741 = vld [vmem:[%s289 + $0x128] sm:$0xff]
        %v742 = vld [vmem:[%s289 + $0x130] sm:$0xff]
        %v743 = vld [vmem:[%s289 + $0x138] sm:$0xff]
        %v744 = vld [vmem:[%s289 + $0x140] sm:$0xff]
        %v745 = vld [vmem:[%s289 + $0x148] sm:$0xff]
        %v746 = vld [vmem:[%s289 + $0x150] sm:$0xff]
        %v747 = vld [vmem:[%s289 + $0x158] sm:$0xff]
        %v748 = vld [vmem:[%s289 + $0x160] sm:$0xff]
        %v749 = vld [vmem:[%s289 + $0x168] sm:$0xff]
        %v750 = vld [vmem:[%s289 + $0x170] sm:$0xff]
        %v751 = vld [vmem:[%s289 + $0x178] sm:$0xff]
        %v752 = vld [vmem:[%s289 + $0x180] sm:$0xff]
        %v753 = vld [vmem:[%s289 + $0x188] sm:$0xff]
        %v754 = vld [vmem:[%s289 + $0x190] sm:$0xff]
        %v755 = vld [vmem:[%s289 + $0x198] sm:$0xff]
        %v756 = vld [vmem:[%s289 + $0x1a0] sm:$0xff]
        %v757 = vld [vmem:[%s289 + $0x1a8] sm:$0xff]
        %v758 = vld [vmem:[%s289 + $0x1b0] sm:$0xff]
        %v759 = vld [vmem:[%s289 + $0x1b8] sm:$0xff]
        %v760 = vld [vmem:[%s289 + $0x1c0] sm:$0xff]
        %v761 = vld [vmem:[%s289 + $0x1c8] sm:$0xff]
        %v762 = vld [vmem:[%s289 + $0x1d0] sm:$0xff]
        %v763 = vld [vmem:[%s289 + $0x1d8] sm:$0xff]
        %v764 = vld [vmem:[%s289 + $0x1e0] sm:$0xff]
        %v765 = vld [vmem:[%s289 + $0x1e8] sm:$0xff]
        %v766 = vld [vmem:[%s289 + $0x1f0] sm:$0xff]
        %v767 = vld [vmem:[%s289 + $0x1f8] sm:$0xff]
        %v832 = vunpack.c.l.b16 %v704
        %v833 = vunpack.c.h.b16 %v704
        %v834 = vunpack.c.l.b16 %v705
        %v835 = vunpack.c.h.b16 %v705
        %v836 = vunpack.c.l.b16 %v706
        %v837 = vunpack.c.h.b16 %v706
        %v838 = vunpack.c.l.b16 %v707
        %v839 = vunpack.c.h.b16 %v707
        %v840 = vunpack.c.l.b16 %v708
        %v841 = vunpack.c.h.b16 %v708
        %v842 = vunpack.c.l.b16 %v709
        %v843 = vunpack.c.h.b16 %v709
        %v844 = vunpack.c.l.b16 %v710
        %v845 = vunpack.c.h.b16 %v710
        %v846 = vunpack.c.l.b16 %v711
        %v847 = vunpack.c.h.b16 %v711
        %v848 = vunpack.c.l.b16 %v712
        %v849 = vunpack.c.h.b16 %v712
        %v850 = vunpack.c.l.b16 %v713
        %v851 = vunpack.c.h.b16 %v713
        %v852 = vunpack.c.l.b16 %v714
        %v853 = vunpack.c.h.b16 %v714
        %v854 = vunpack.c.l.b16 %v715
        %v855 = vunpack.c.h.b16 %v715
        %v856 = vunpack.c.l.b16 %v716
        %v857 = vunpack.c.h.b16 %v716
        %v858 = vunpack.c.l.b16 %v717
        %v859 = vunpack.c.h.b16 %v717
        %v860 = vunpack.c.l.b16 %v718
        %v861 = vunpack.c.h.b16 %v718
        %v862 = vunpack.c.l.b16 %v719
        %v863 = vunpack.c.h.b16 %v719
        %v864 = vunpack.c.l.b16 %v720
        %v865 = vunpack.c.h.b16 %v720
        %v866 = vunpack.c.l.b16 %v721
        %v867 = vunpack.c.h.b16 %v721
        %v868 = vunpack.c.l.b16 %v722
        %v869 = vunpack.c.h.b16 %v722
        %v870 = vunpack.c.l.b16 %v723
        %v871 = vunpack.c.h.b16 %v723
        %v872 = vunpack.c.l.b16 %v724
        %v873 = vunpack.c.h.b16 %v724
        %v874 = vunpack.c.l.b16 %v725
        %v875 = vunpack.c.h.b16 %v725
        %v876 = vunpack.c.l.b16 %v726
        %v877 = vunpack.c.h.b16 %v726
        %v878 = vunpack.c.l.b16 %v727
        %v879 = vunpack.c.h.b16 %v727
        %v880 = vunpack.c.l.b16 %v728
        %v881 = vunpack.c.h.b16 %v728
        %v882 = vunpack.c.l.b16 %v729
        %v883 = vunpack.c.h.b16 %v729
        %v884 = vunpack.c.l.b16 %v730
        %v885 = vunpack.c.h.b16 %v730
        %v886 = vunpack.c.l.b16 %v731
        %v887 = vunpack.c.h.b16 %v731
        %v888 = vunpack.c.l.b16 %v732
        %v889 = vunpack.c.h.b16 %v732
        %v890 = vunpack.c.l.b16 %v733
        %v891 = vunpack.c.h.b16 %v733
        %v892 = vunpack.c.l.b16 %v734
        %v893 = vunpack.c.h.b16 %v734
        %v894 = vunpack.c.l.b16 %v735
        %v895 = vunpack.c.h.b16 %v735
        %v896 = vunpack.c.l.b16 %v736
        %v897 = vunpack.c.h.b16 %v736
        %v898 = vunpack.c.l.b16 %v737
        %v899 = vunpack.c.h.b16 %v737
        %v900 = vunpack.c.l.b16 %v738
        %v901 = vunpack.c.h.b16 %v738
        %v902 = vunpack.c.l.b16 %v739
        %v903 = vunpack.c.h.b16 %v739
        %v904 = vunpack.c.l.b16 %v740
        %v905 = vunpack.c.h.b16 %v740
        %v906 = vunpack.c.l.b16 %v741
        %v907 = vunpack.c.h.b16 %v741
        %v908 = vunpack.c.l.b16 %v742
        %v909 = vunpack.c.h.b16 %v742
        %v910 = vunpack.c.l.b16 %v743
        %v911 = vunpack.c.h.b16 %v743
        %v912 = vunpack.c.l.b16 %v744
        %v913 = vunpack.c.h.b16 %v744
        %v914 = vunpack.c.l.b16 %v745
        %v915 = vunpack.c.h.b16 %v745
        %v916 = vunpack.c.l.b16 %v746
        %v917 = vunpack.c.h.b16 %v746
        %v918 = vunpack.c.l.b16 %v747
        %v919 = vunpack.c.h.b16 %v747
        %v920 = vunpack.c.l.b16 %v748
        %v921 = vunpack.c.h.b16 %v748
        %v922 = vunpack.c.l.b16 %v749
        %v923 = vunpack.c.h.b16 %v749
        %v924 = vunpack.c.l.b16 %v750
        %v925 = vunpack.c.h.b16 %v750
        %v926 = vunpack.c.l.b16 %v751
        %v927 = vunpack.c.h.b16 %v751
        %v928 = vunpack.c.l.b16 %v752
        %v929 = vunpack.c.h.b16 %v752
        %v930 = vunpack.c.l.b16 %v753
        %v931 = vunpack.c.h.b16 %v753
        %v932 = vunpack.c.l.b16 %v754
        %v933 = vunpack.c.h.b16 %v754
        %v934 = vunpack.c.l.b16 %v755
        %v935 = vunpack.c.h.b16 %v755
        %v936 = vunpack.c.l.b16 %v756
        %v937 = vunpack.c.h.b16 %v756
        %v938 = vunpack.c.l.b16 %v757
        %v939 = vunpack.c.h.b16 %v757
        %v940 = vunpack.c.l.b16 %v758
        %v941 = vunpack.c.h.b16 %v758
        %v942 = vunpack.c.l.b16 %v759
        %v943 = vunpack.c.h.b16 %v759
        %v944 = vunpack.c.l.b16 %v760
        %v945 = vunpack.c.h.b16 %v760
        %v946 = vunpack.c.l.b16 %v761
        %v947 = vunpack.c.h.b16 %v761
        %v948 = vunpack.c.l.b16 %v762
        %v949 = vunpack.c.h.b16 %v762
        %v950 = vunpack.c.l.b16 %v763
        %v951 = vunpack.c.h.b16 %v763
        %v952 = vunpack.c.l.b16 %v764
        %v953 = vunpack.c.h.b16 %v764
        %v954 = vunpack.c.l.b16 %v765
        %v955 = vunpack.c.h.b16 %v765
        %v956 = vunpack.c.l.b16 %v766
        %v957 = vunpack.c.h.b16 %v766
        %v958 = vunpack.c.l.b16 %v767
        %v959 = vunpack.c.h.b16 %v767
        %v960 = vpack.c.b16 %v834, %v832
        %v961 = vpack.c.b16 %v835, %v833
        %v962 = vpack.c.b16 %v838, %v836
        %v963 = vpack.c.b16 %v839, %v837
        %v964 = vpack.c.b16 %v842, %v840
        %v965 = vpack.c.b16 %v843, %v841
        %v966 = vpack.c.b16 %v846, %v844
        %v967 = vpack.c.b16 %v847, %v845
        %v968 = vpack.c.b16 %v850, %v848
        %v969 = vpack.c.b16 %v851, %v849
        %v970 = vpack.c.b16 %v854, %v852
        %v971 = vpack.c.b16 %v855, %v853
        %v972 = vpack.c.b16 %v858, %v856
        %v973 = vpack.c.b16 %v859, %v857
        %v974 = vpack.c.b16 %v862, %v860
        %v975 = vpack.c.b16 %v863, %v861
        %v976 = vpack.c.b16 %v866, %v864
        %v977 = vpack.c.b16 %v867, %v865
        %v978 = vpack.c.b16 %v870, %v868
        %v979 = vpack.c.b16 %v871, %v869
        %v980 = vpack.c.b16 %v874, %v872
        %v981 = vpack.c.b16 %v875, %v873
        %v982 = vpack.c.b16 %v878, %v876
        %v983 = vpack.c.b16 %v879, %v877
        %v984 = vpack.c.b16 %v882, %v880
        %v985 = vpack.c.b16 %v883, %v881
        %v986 = vpack.c.b16 %v886, %v884
        %v987 = vpack.c.b16 %v887, %v885
        %v988 = vpack.c.b16 %v890, %v888
        %v989 = vpack.c.b16 %v891, %v889
        %v990 = vpack.c.b16 %v894, %v892
        %v991 = vpack.c.b16 %v895, %v893
        %v992 = vpack.c.b16 %v898, %v896
        %v993 = vpack.c.b16 %v899, %v897
        %v994 = vpack.c.b16 %v902, %v900
        %v995 = vpack.c.b16 %v903, %v901
        %v996 = vpack.c.b16 %v906, %v904
        %v997 = vpack.c.b16 %v907, %v905
        %v998 = vpack.c.b16 %v910, %v908
        %v999 = vpack.c.b16 %v911, %v909
        %v1000 = vpack.c.b16 %v914, %v912
        %v1001 = vpack.c.b16 %v915, %v913
        %v1002 = vpack.c.b16 %v918, %v916
        %v1003 = vpack.c.b16 %v919, %v917
        %v1004 = vpack.c.b16 %v922, %v920
        %v1005 = vpack.c.b16 %v923, %v921
        %v1006 = vpack.c.b16 %v926, %v924
        %v1007 = vpack.c.b16 %v927, %v925
        %v1008 = vpack.c.b16 %v930, %v928
        %v1009 = vpack.c.b16 %v931, %v929
        %v1010 = vpack.c.b16 %v934, %v932
        %v1011 = vpack.c.b16 %v935, %v933
        %v1012 = vpack.c.b16 %v938, %v936
        %v1013 = vpack.c.b16 %v939, %v937
        %v1014 = vpack.c.b16 %v942, %v940
        %v1015 = vpack.c.b16 %v943, %v941
        %v1016 = vpack.c.b16 %v946, %v944
        %v1017 = vpack.c.b16 %v947, %v945
        %v1018 = vpack.c.b16 %v950, %v948
        %v1019 = vpack.c.b16 %v951, %v949
        %v1020 = vpack.c.b16 %v954, %v952
        %v1021 = vpack.c.b16 %v955, %v953
        %v1022 = vpack.c.b16 %v958, %v956
        %v1023 = vpack.c.b16 %v959, %v957
        %1088 = vmatpush.bf16.msra.mxu0 %v974
        %1089 = vmatpush.bf16.msra.mxu0 %v972
        %1090 = vmatpush.bf16.msra.mxu0 %v970
        %1091 = vmatpush.bf16.msra.mxu0 %v968
        %1092 = vmatpush.bf16.msra.mxu0 %v966
        %1093 = vmatpush.bf16.msra.mxu0 %v964
        %1094 = vmatpush.bf16.msra.mxu0 %v962
        %1095 = vmatpush.bf16.msra.mxu0 %v960
        %1096 = vmatmul.bf16.gmra.mxu0 %v698
        %v1097 = vpop.f32.mrf.mxu0
        %v1098 = vadd.f32 0.0, %v1097
        %v1099 = vpop.f32.mrf.mxu0
        %1100 = vdwg.mxu0
        %1101 = vmatpush.bf16.msra.mxu0 %v990
        %1102 = vmatpush.bf16.msra.mxu0 %v988
        %1103 = vmatpush.bf16.msra.mxu0 %v986
        %1104 = vmatpush.bf16.msra.mxu0 %v984
        %1105 = vmatpush.bf16.msra.mxu0 %v982
        %1106 = vmatpush.bf16.msra.mxu0 %v980
        %1107 = vmatpush.bf16.msra.mxu0 %v978
        %1108 = vmatpush.bf16.msra.mxu0 %v976
        %1109 = vmatmul.bf16.gmra.mxu0 %v699
        %v1110 = vpop.f32.mrf.mxu0
        %v1111 = vadd.f32 %v1098, %v1110
        %v1112 = vpop.f32.mrf.mxu0
        %1113 = vdwg.mxu0
        %1114 = vmatpush.bf16.msra.mxu0 %v1006
        %1115 = vmatpush.bf16.msra.mxu0 %v1004
        %1116 = vmatpush.bf16.msra.mxu0 %v1002
        %1117 = vmatpush.bf16.msra.mxu0 %v1000
        %1118 = vmatpush.bf16.msra.mxu0 %v998
        %1119 = vmatpush.bf16.msra.mxu0 %v996
        %1120 = vmatpush.bf16.msra.mxu0 %v994
        %1121 = vmatpush.bf16.msra.mxu0 %v992
        %1122 = vmatmul.bf16.gmra.mxu0 %v700
        %v1123 = vpop.f32.mrf.mxu0
        %v1124 = vadd.f32 %v1111, %v1123
        %v1125 = vpop.f32.mrf.mxu0
        %1126 = vdwg.mxu0
        %1127 = vmatpush.bf16.msra.mxu0 %v1022
        %1128 = vmatpush.bf16.msra.mxu0 %v1020
        %1129 = vmatpush.bf16.msra.mxu0 %v1018
        %1130 = vmatpush.bf16.msra.mxu0 %v1016
        %1131 = vmatpush.bf16.msra.mxu0 %v1014
        %1132 = vmatpush.bf16.msra.mxu0 %v1012
        %1133 = vmatpush.bf16.msra.mxu0 %v1010
        %1134 = vmatpush.bf16.msra.mxu0 %v1008
        %1135 = vmatmul.bf16.gmra.mxu0 %v701
        %v1136 = vpop.f32.mrf.mxu0
        %v1137 = vadd.f32 %v1124, %v1136
        %v1138 = vpop.f32.mrf.mxu0
        %1139 = vdwg.mxu0
        %1140 = vmatpush.bf16.msra.mxu0 %v975
        %1141 = vmatpush.bf16.msra.mxu0 %v973
        %1142 = vmatpush.bf16.msra.mxu0 %v971
        %1143 = vmatpush.bf16.msra.mxu0 %v969
        %1144 = vmatpush.bf16.msra.mxu0 %v967
        %1145 = vmatpush.bf16.msra.mxu0 %v965
        %1146 = vmatpush.bf16.msra.mxu0 %v963
        %1147 = vmatpush.bf16.msra.mxu0 %v961
        %1148 = vmatmul.bf16.gmra.mxu0 %v698
        %v1149 = vpop.f32.mrf.mxu0
        %v1150 = vadd.f32 0.0, %v1149
        %v1151 = vpop.f32.mrf.mxu0
        %1152 = vdwg.mxu0
        %1153 = vmatpush.bf16.msra.mxu0 %v991
        %1154 = vmatpush.bf16.msra.mxu0 %v989
        %1155 = vmatpush.bf16.msra.mxu0 %v987
        %1156 = vmatpush.bf16.msra.mxu0 %v985
        %1157 = vmatpush.bf16.msra.mxu0 %v983
        %1158 = vmatpush.bf16.msra.mxu0 %v981
        %1159 = vmatpush.bf16.msra.mxu0 %v979
        %1160 = vmatpush.bf16.msra.mxu0 %v977
        %1161 = vmatmul.bf16.gmra.mxu0 %v699
        %v1162 = vpop.f32.mrf.mxu0
        %v1163 = vadd.f32 %v1150, %v1162
        %v1164 = vpop.f32.mrf.mxu0
        %1165 = vdwg.mxu0
        %1166 = vmatpush.bf16.msra.mxu0 %v1007
        %1167 = vmatpush.bf16.msra.mxu0 %v1005
        %1168 = vmatpush.bf16.msra.mxu0 %v1003
        %1169 = vmatpush.bf16.msra.mxu0 %v1001
        %1170 = vmatpush.bf16.msra.mxu0 %v999
        %1171 = vmatpush.bf16.msra.mxu0 %v997
        %1172 = vmatpush.bf16.msra.mxu0 %v995
        %1173 = vmatpush.bf16.msra.mxu0 %v993
        %1174 = vmatmul.bf16.gmra.mxu0 %v700
        %v1175 = vpop.f32.mrf.mxu0
        %v1176 = vadd.f32 %v1163, %v1175
        %v1177 = vpop.f32.mrf.mxu0
        %1178 = vdwg.mxu0
        %1179 = vmatpush.bf16.msra.mxu0 %v1023
        %1180 = vmatpush.bf16.msra.mxu0 %v1021
        %1181 = vmatpush.bf16.msra.mxu0 %v1019
        %1182 = vmatpush.bf16.msra.mxu0 %v1017
        %1183 = vmatpush.bf16.msra.mxu0 %v1015
        %1184 = vmatpush.bf16.msra.mxu0 %v1013
        %1185 = vmatpush.bf16.msra.mxu0 %v1011
        %1186 = vmatpush.bf16.msra.mxu0 %v1009
        %1187 = vmatmul.bf16.gmra.mxu0 %v701
        %v1188 = vpop.f32.mrf.mxu0
        %v1189 = vadd.f32 %v1176, %v1188
        %v1190 = vpop.f32.mrf.mxu0
        %1191 = vdwg.mxu0
        %v1192 = vadd.f32 %v702, %v1137
        %v1193 = vadd.f32 %v703, %v1189
        %1194 = vst [vmem:[#allocation4] sm:$0xff] %v1192
        %1195 = vst [vmem:[#allocation4 + $0x8] sm:$0xff] %v1193
        %p1196 = scmp.eq.s32.totalorder %s36, 1
        // Predicated region
        $region89: #{sstkg_forward.1} parent=35 // pred_check
          %p1197 = pneg %p1196
        $region90: #{sstkg_forward.1} parent=35 // pred_check_branch
          %1199 = sbr.rel (%p1197) target = $region92
        $region91: #{sstkg_forward.1} parent=35 // pred_region
          %v1200 = vld [vmem:[#allocation4] sm:$0xff]
          %v1201 = vld [vmem:[#allocation4 + $0x8] sm:$0xff]
          %1202 = vst [vmem:[#allocation20] sm:$0xff] %v1200
          %1203 = vst [vmem:[#allocation20 + $0x8] sm:$0xff] %v1201
        $region92: #{sstkg_forward.1} parent=35 // pred_fallthru
          _
        // Predicated region
        $region93: #{sstkg_forward.1} parent=35 // pred_check
          %p1204 = pneg %p138
        $region94: #{sstkg_forward.1} parent=35 // pred_check_branch
          %1206 = sbr.rel (%p1204) target = $region96
        $region95: #{sstkg_forward.1} parent=35 // pred_region
          %1208 = vsyncadd [#allocation11], 0
          %s1210 = sshll.u32 [#allocation17], 4
          %s1211 = int_to_ptr.vmem [resolvable:$true] %s1210
          %s1212 = sshll.u32 %s7, 4
          %s1213 = int_to_ptr.hbm [resolvable:$true] %s1212
          %1215 = dma.vmem_to_hbm [thread:$0]  %s1211, 128, %s1213, [#allocation11]
        $region96: #{sstkg_forward.1} parent=35 // pred_fallthru
          _
        // Predicated region
        $region97: #{sstkg_forward.1} parent=35 // pred_check
          %p1216 = pneg %p159
        $region98: #{sstkg_forward.1} parent=35 // pred_check_branch
          %1218 = sbr.rel (%p1216) target = $region100
        $region99: #{sstkg_forward.1} parent=35 // pred_region
          %1220 = vsyncadd [#allocation19], 0
          %s1222 = sshll.u32 [#allocation18], 4
          %s1223 = int_to_ptr.vmem [resolvable:$true] %s1222
          %s1224 = sshll.u32 %s8, 4
          %s1225 = int_to_ptr.hbm [resolvable:$true] %s1224
          %1227 = dma.vmem_to_hbm [thread:$0]  %s1223, 128, %s1225, [#allocation19]
        $region100: #{sstkg_forward.1} parent=35 // pred_fallthru
          _
        // Predicated region
        $region101: #{sstkg_forward.1} parent=35 // pred_check
          %p1228 = pneg %p180
        $region102: #{sstkg_forward.1} parent=35 // pred_check_branch
          %1230 = sbr.rel (%p1228) target = $region104
        $region103: #{sstkg_forward.1} parent=35 // pred_region
          %1232 = vsyncadd [#allocation19], 0
          %s1234 = sshll.u32 [#allocation20], 4
          %s1235 = int_to_ptr.vmem [resolvable:$true] %s1234
          %s1236 = sshll.u32 %s9, 4
          %s1237 = int_to_ptr.hbm [resolvable:$true] %s1236
          %1239 = dma.vmem_to_hbm [thread:$0]  %s1235, 256, %s1237, [#allocation19]
        $region104: #{sstkg_forward.1} parent=35 // pred_fallthru
          _
        // Predicated region
        $region105: #{sstkg_forward.1} parent=35 // pred_check
          %p1240 = pneg %p138
        $region106: #{sstkg_forward.1} parent=35 // pred_check_branch
          %1242 = sbr.rel (%p1240) target = $region108
        $region107: #{sstkg_forward.1} parent=35 // pred_region
          %1244 = dma.done [#allocation11], 128
        $region108: #{sstkg_forward.1} parent=35 // pred_fallthru
          _
        // Predicated region
        $region109: #{sstkg_forward.1} parent=35 // pred_check
          %p1245 = pneg %p159
        $region110: #{sstkg_forward.1} parent=35 // pred_check_branch
          %1247 = sbr.rel (%p1245) target = $region112
        $region111: #{sstkg_forward.1} parent=35 // pred_region
          %1249 = dma.done [#allocation19], 128
        $region112: #{sstkg_forward.1} parent=35 // pred_fallthru
          _
        // Predicated region
        $region113: #{sstkg_forward.1} parent=35 // pred_check
          %p1250 = pneg %p180
        $region114: #{sstkg_forward.1} parent=35 // pred_check_branch
          %1252 = sbr.rel (%p1250) target = $region116
        $region115: #{sstkg_forward.1} parent=35 // pred_region
          %1254 = dma.done [#allocation19], 256
        $region116: #{sstkg_forward.1} parent=35 // pred_fallthru
          _
      $region36: #{sstkg_forward.1} parent=5 // pred_fallthru
        _
      %p1255 = scmp.le.s32.totalorder 2, %s31
      // Predicated region
      $region117: #{sstkg_forward.1} parent=5 // pred_check
        %p1256 = pneg %p1255
      $region118: #{sstkg_forward.1} parent=5 // pred_check_branch
        %1258 = sbr.rel (%p1256) target = $region120
      $region119: #{sstkg_forward.1} parent=5 // pred_region
        %s1259 = ssub.s32 %s31, 2
      $region120: #{sstkg_forward.1} parent=5 // pred_fallthru
        _
    $region6: #{sstkg_forward.1} parent=1 // loop_footer
      %s35 = sadd.s32 1, %s31
    $region7: #{sstkg_forward.1} parent=1 // loop_footer_branch
      %30 = sbr.rel target = $region3
    $region8: #{sstkg_forward.1} parent=1 // loop_exit
      _
    %1260 = vsyncpa [#allocation10], 1
    %s1261 = scalar_lea.sflag [#allocation10], 1
    %1262 = vsyncpa %s1261, 1
    %1263 = vsyncpa [#allocation13], 1
    %1264 = vsyncpa [#allocation16], 1
    %s1265 = scalar_lea.sflag [#allocation16], 1
    %1266 = vsyncpa %s1265, 1
    %1267 = vsyncpa [#allocation11], 1
    %s1268 = scalar_lea.sflag [#allocation11], 1
    %1269 = vsyncpa %s1268, 1
    %1270 = vsyncpa [#allocation19], 1
  %1271 = vsyncmov [#allocation5]
  %s1272 = vpop.sfrf %1271
  %p1273 = scmp.eq.s32.totalorder %s1272, 0
  %p1274 = pneg %p1273
  %1276 = shalt.err (%p1274)
  %s1277 = scalar_lea.sflag [#allocation5], 1
  %1278 = vsyncmov %s1277
  %s1279 = vpop.sfrf %1278
  %p1280 = scmp.eq.s32.totalorder %s1279, 0
  %p1281 = pneg %p1280
  %1283 = shalt.err (%p1281)
  %s1284 = scalar_lea.sflag [#allocation5], 2
  %1285 = vsyncmov %s1284
  %s1286 = vpop.sfrf %1285
  %p1287 = scmp.eq.s32.totalorder %s1286, 0
  %p1288 = pneg %p1287
  %1290 = shalt.err (%p1288)
  %s1291 = scalar_lea.sflag [#allocation5], 3
  %1292 = vsyncmov %s1291
  %s1293 = vpop.sfrf %1292
  %p1294 = scmp.eq.s32.totalorder %s1293, 0
  %p1295 = pneg %p1294
  %1297 = shalt.err (%p1295)
  %s1298 = scalar_lea.sflag [#allocation5], 4
  %1299 = vsyncmov %s1298
  %s1300 = vpop.sfrf %1299
  %p1301 = scmp.eq.s32.totalorder %s1300, 0
  %p1302 = pneg %p1301
  %1304 = shalt.err (%p1302)
  %s1305 = scalar_lea.sflag [#allocation5], 5
  %1306 = vsyncmov %s1305
  %s1307 = vpop.sfrf %1306
  %p1308 = scmp.eq.s32.totalorder %s1307, 0
  %p1309 = pneg %p1308
  %1311 = shalt.err (%p1309)
  %s1312 = scalar_lea.sflag [#allocation5], 6
  %1313 = vsyncmov %s1312
  %s1314 = vpop.sfrf %1313
  %p1315 = scmp.eq.s32.totalorder %s1314, 0
  %p1316 = pneg %p1315
  %1318 = shalt.err (%p1316)
  %s1319 = scalar_lea.sflag [#allocation5], 7
  %1320 = vsyncmov %s1319
  %s1321 = vpop.sfrf %1320
  %p1322 = scmp.eq.s32.totalorder %s1321, 0
  %p1323 = pneg %p1322
  %1325 = shalt.err (%p1323)
  %1326 = vsyncmov [#allocation6]
  %s1327 = vpop.sfrf %1326
  %p1328 = scmp.eq.s32.totalorder %s1327, 0
  %p1329 = pneg %p1328
  %1331 = shalt.err (%p1329)
  %s1332 = scalar_lea.sflag [#allocation6], 1
  %1333 = vsyncmov %s1332
  %s1334 = vpop.sfrf %1333
  %p1335 = scmp.eq.s32.totalorder %s1334, 0
  %p1336 = pneg %p1335
  %1338 = shalt.err (%p1336)
  %s1339 = scalar_lea.sflag [#allocation6], 2
  %1340 = vsyncmov %s1339
  %s1341 = vpop.sfrf %1340
  %p1342 = scmp.eq.s32.totalorder %s1341, 0
  %p1343 = pneg %p1342
  %1345 = shalt.err (%p1343)
  %s1346 = scalar_lea.sflag [#allocation6], 3
  %1347 = vsyncmov %s1346
  %s1348 = vpop.sfrf %1347
  %p1349 = scmp.eq.s32.totalorder %s1348, 0
  %p1350 = pneg %p1349
  %1352 = shalt.err (%p1350)
  %s1353 = scalar_lea.sflag [#allocation6], 4
  %1354 = vsyncmov %s1353
  %s1355 = vpop.sfrf %1354
  %p1356 = scmp.eq.s32.totalorder %s1355, 0
  %p1357 = pneg %p1356
  %1359 = shalt.err (%p1357)
  %s1360 = scalar_lea.sflag [#allocation6], 5
  %1361 = vsyncmov %s1360
  %s1362 = vpop.sfrf %1361
  %p1363 = scmp.eq.s32.totalorder %s1362, 0
  %p1364 = pneg %p1363
  %1366 = shalt.err (%p1364)
  %s1367 = scalar_lea.sflag [#allocation6], 6
  %1368 = vsyncmov %s1367
  %s1369 = vpop.sfrf %1368
  %p1370 = scmp.eq.s32.totalorder %s1369, 0
  %p1371 = pneg %p1370
  %1373 = shalt.err (%p1371)
  %s1374 = scalar_lea.sflag [#allocation6], 7
  %1375 = vsyncmov %s1374
  %s1376 = vpop.sfrf %1375
  %p1377 = scmp.eq.s32.totalorder %s1376, 0
  %p1378 = pneg %p1377
  %1380 = shalt.err (%p1378)

</llo_original>
